<compile_context>
chip_gen: v7x
topology: tpu7x:2x2x1
jax: 0.10.0
libtpu: 0.0.40
codegen_flags: <defaults>
</compile_context>

<pallas_src>
import jax
import jax.numpy as jnp
from jax.experimental import pallas as pl
from jax.experimental.pallas import tpu as pltpu

LANE = 128  # TPU vreg lane width


def lstm_kernel(x_ref, w_ih_ref, w_hh_ref, b_ref, w_lin_ref, b_lin_ref, out_ref):
    """Full LSTM recurrence + final linear projection in one kernel.

    x_ref     : (S, I)      f32   input sequence
    w_ih_ref  : (I, 4*Hp)   f32   input->gates weights (transposed, gate-padded)
    w_hh_ref  : (Hp, 4*Hp)  f32   hidden->gates weights (transposed, padded)
    b_ref     : (1, 4*Hp)   f32   combined bias (b_ih + b_hh), gate-padded
    w_lin_ref : (O, Hp)     f32   final linear weights (row per output, padded)
    b_lin_ref : (1, O)      f32   final linear bias
    out_ref   : (1, O)      f32   prediction for the LAST timestep
    """
    S, I = x_ref.shape
    Hp = w_hh_ref.shape[0]
    O = out_ref.shape[1]

    w_hh = w_hh_ref[...]

    # ---- Hoisted input projection (no recurrent dependency), bias added once.
    if I == 1:
        # (S,1) * (1,4Hp) broadcast multiply on the VPU — skip the MXU entirely.
        x_proj = x_ref[...] * w_ih_ref[...] + b_ref[...]
    else:
        x_proj = jnp.dot(x_ref[...], w_ih_ref[...],
                         preferred_element_type=jnp.float32) + b_ref[...]

    h = jnp.zeros((1, Hp), jnp.float32)
    c = jnp.zeros((1, Hp), jnp.float32)

    # ---- Fully unrolled serial recurrence (S is static and small).
    for t in range(S):
        gates = x_proj[t:t + 1, :] + jnp.dot(
            h, w_hh, preferred_element_type=jnp.float32)        # (1, 4Hp)
        # Each gate slice is a full 128-lane-aligned chunk (Hp % 128 == 0).
        i = jax.nn.sigmoid(gates[:, 0 * Hp:1 * Hp])
        f = jax.nn.sigmoid(gates[:, 1 * Hp:2 * Hp])
        g = jnp.tanh(gates[:, 2 * Hp:3 * Hp])
        o = jax.nn.sigmoid(gates[:, 3 * Hp:4 * Hp])
        c = f * c + i * g
        h = o * jnp.tanh(c)

    # ---- Final linear projection on the last hidden state.
    if O == 1:
        # Degenerate MXU shape -> VPU multiply + lane reduction instead.
        out_ref[...] = (jnp.sum(h * w_lin_ref[...], axis=-1, keepdims=True)
                        + b_lin_ref[...])
    else:
        out_ref[...] = (jax.lax.dot_general(
            h, w_lin_ref[...], (((1,), (1,)), ((), ())),
            preferred_element_type=jnp.float32) + b_lin_ref[...])


def prepare_lstm_params(w_ih, w_hh, b_ih, b_hh, w_lin, b_lin):
    """One-time layout prep: transpose, combine biases, pad H to a lane multiple.

    PyTorch layouts in:
      w_ih : (4H, I), w_hh : (4H, H), b_ih/b_hh : (4H,),
      w_lin: (O, H),  b_lin: (O,)
    Returns padded / transposed params for the kernel (gate order i,f,g,o kept).
    """
    w_ih = jnp.asarray(w_ih, jnp.float32)
    w_hh = jnp.asarray(w_hh, jnp.float32)
    b = jnp.asarray(b_ih, jnp.float32) + jnp.asarray(b_hh, jnp.float32)
    w_lin = jnp.asarray(w_lin, jnp.float32)
    b_lin = jnp.asarray(b_lin, jnp.float32)

    H = w_hh.shape[1]
    I = w_ih.shape[1]
    O = w_lin.shape[0]
    Hp = ((H + LANE - 1) // LANE) * LANE

    def pad_gate_weight(w, in_dim, pad_in):
        # w: (4H, in_dim) -> (in_dim_padded, 4*Hp), zero padding so padded
        # hidden lanes contribute nothing and padded gate lanes read zero.
        wg = w.reshape(4, H, in_dim)                           # (4, H, in)
        wg = jnp.pad(wg, ((0, 0), (0, Hp - H), (0, 0)))        # pad gate-out units
        if pad_in:
            wg = jnp.pad(wg, ((0, 0), (0, 0), (0, Hp - in_dim)))
        in_p = wg.shape[-1]
        return jnp.transpose(wg, (2, 0, 1)).reshape(in_p, 4 * Hp)

    w_ih_p = pad_gate_weight(w_ih, I, pad_in=False)            # (I, 4Hp)
    w_hh_p = pad_gate_weight(w_hh, H, pad_in=True)             # (Hp, 4Hp)

    b_p = jnp.pad(b.reshape(4, H), ((0, 0), (0, Hp - H))).reshape(1, 4 * Hp)
    w_lin_p = jnp.pad(w_lin, ((0, 0), (0, Hp - H)))            # (O, Hp)
    b_lin_p = b_lin.reshape(1, O)

    return (w_ih_p, w_hh_p, b_p, w_lin_p, b_lin_p)


def lstm_forward(x, params):
    """x: (seq_len, input_size) f32 -> (output_size,) prediction at last step."""
    w_ih_p, w_hh_p, b_p, w_lin_p, b_lin_p = params
    O = w_lin_p.shape[0]
    vmem = pl.BlockSpec(memory_space=pltpu.MemorySpace.VMEM)
    out = pl.pallas_call(
        lstm_kernel,
        out_shape=jax.ShapeDtypeStruct((1, O), jnp.float32),
        in_specs=[vmem] * 6,
        out_specs=vmem,
    )(jnp.asarray(x, jnp.float32), w_ih_p, w_hh_p, b_p, w_lin_p, b_lin_p)
    return out.reshape(O)


def lstm_reference(x, w_ih, w_hh, b_ih, b_hh, w_lin, b_lin):
    """Pure-JAX reference matching torch.nn.LSTM + nn.Linear semantics."""
    H = w_hh.shape[1]
    h = jnp.zeros((H,), jnp.float32)
    c = jnp.zeros((H,), jnp.float32)

    def step(carry, x_t):
        h, c = carry
        gates = w_ih @ x_t + b_ih + w_hh @ h + b_hh
        i = jax.nn.sigmoid(gates[0 * H:1 * H])
        f = jax.nn.sigmoid(gates[1 * H:2 * H])
        g = jnp.tanh(gates[2 * H:3 * H])
        o = jax.nn.sigmoid(gates[3 * H:4 * H])
        c_new = f * c + i * g
        h_new = o * jnp.tanh(c_new)
        return (h_new, c_new), h_new

    (h_final, _), _ = jax.lax.scan(step, (h, c), x)
    return w_lin @ h_final + b_lin


if __name__ == "__main__":
    # Small shapes consistent with the module's forward pass.
    seq_len = 8
    input_size = 1
    hidden = 32
    output_size = 1

    key = jax.random.PRNGKey(0)
    k_x, k_wih, k_whh, k_bih, k_bhh, k_wl, k_bl = jax.random.split(key, 7)

    # PyTorch default init: U(-1/sqrt(H), 1/sqrt(H))
    bound = 1.0 / jnp.sqrt(jnp.float32(hidden))
    u = lambda k, shape: jax.random.uniform(k, shape, jnp.float32, -bound, bound)

    x = jax.random.normal(k_x, (seq_len, input_size), jnp.float32)
    w_ih = u(k_wih, (4 * hidden, input_size))
    w_hh = u(k_whh, (4 * hidden, hidden))
    b_ih = u(k_bih, (4 * hidden,))
    b_hh = u(k_bhh, (4 * hidden,))
    w_lin = u(k_wl, (output_size, hidden))
    b_lin = u(k_bl, (output_size,))

    # Layout prep done ONCE, outside the per-call path.
    params = jax.tree_util.tree_map(jax.block_until_ready,
                                    prepare_lstm_params(w_ih, w_hh, b_ih, b_hh,
                                                        w_lin, b_lin))

    forward = jax.jit(lstm_forward)
    pred = jax.block_until_ready(forward(x, params))

    ref = lstm_reference(x, w_ih, w_hh, b_ih, b_hh, w_lin, b_lin)
    assert pred.shape == (output_size,)
    assert jnp.allclose(pred, ref, atol=1e-5, rtol=1e-5), (pred, ref)

    print("KERNEL_OK")
</pallas_src>

<mosaic_0001>
module attributes {stable_mosaic.version = 11 : i64} {
  func.func @lstm_kernel(%arg0: memref<8x1xf32, #tpu.memory_space<vmem>>, %arg1: memref<1x512xf32, #tpu.memory_space<vmem>>, %arg2: memref<128x512xf32, #tpu.memory_space<vmem>>, %arg3: memref<1x512xf32, #tpu.memory_space<vmem>>, %arg4: memref<1x128xf32, #tpu.memory_space<vmem>>, %arg5: memref<1x1xf32, #tpu.memory_space<vmem>>, %arg6: memref<1x1xf32, #tpu.memory_space<vmem>>) attributes {dimension_semantics = [], scalar_prefetch = 0 : i64, scratch_operands = 0 : i64, tpu.core_type = #tpu.core_type<tc>} {
    %c0 = arith.constant 0 : index
    %c0_0 = arith.constant 0 : index
    %0 = vector.load %arg2[%c0, %c0_0] : memref<128x512xf32, #tpu.memory_space<vmem>>, vector<128x512xf32>
    %c0_1 = arith.constant 0 : index
    %c0_2 = arith.constant 0 : index
    %1 = vector.load %arg0[%c0_1, %c0_2] : memref<8x1xf32, #tpu.memory_space<vmem>>, vector<8x1xf32>
    %c0_3 = arith.constant 0 : index
    %c0_4 = arith.constant 0 : index
    %2 = vector.load %arg1[%c0_3, %c0_4] : memref<1x512xf32, #tpu.memory_space<vmem>>, vector<1x512xf32>
    %3 = vector.broadcast %1 : vector<8x1xf32> to vector<8x512xf32>
    %4 = vector.broadcast %2 : vector<1x512xf32> to vector<8x512xf32>
    %5 = arith.mulf %3, %4 : vector<8x512xf32>
    %c0_5 = arith.constant 0 : index
    %c0_6 = arith.constant 0 : index
    %6 = vector.load %arg3[%c0_5, %c0_6] : memref<1x512xf32, #tpu.memory_space<vmem>>, vector<1x512xf32>
    %7 = vector.broadcast %6 : vector<1x512xf32> to vector<8x512xf32>
    %8 = arith.addf %5, %7 : vector<8x512xf32>
    %cst = arith.constant 0.000000e+00 : f32
    %9 = vector.broadcast %cst : f32 to vector<1x128xf32>
    %cst_7 = arith.constant 0.000000e+00 : f32
    %10 = vector.broadcast %cst_7 : f32 to vector<1x128xf32>
    %11 = vector.extract_strided_slice %8 {offsets = [0, 0], sizes = [1, 512], strides = [1, 1]} : vector<8x512xf32> to vector<1x512xf32>
    %cst_8 = arith.constant dense<0.000000e+00> : vector<1x512xf32>
    %12 = tpu.matmul %9, %0, %cst_8 {dimension_numbers = #tpu.dot_dimension_numbers<[1], [0], [0], [1], [0, 0, 1, 1], [], []>} : vector<1x128xf32>, vector<128x512xf32>, vector<1x512xf32> -> vector<1x512xf32>
    %13 = arith.addf %11, %12 : vector<1x512xf32>
    %14 = vector.extract_strided_slice %13 {offsets = [0, 0], sizes = [1, 128], strides = [1, 1]} : vector<1x512xf32> to vector<1x128xf32>
    %15 = arith.negf %14 : vector<1x128xf32>
    %16 = math.exp %15 : vector<1x128xf32>
    %cst_9 = arith.constant 1.000000e+00 : f32
    %17 = vector.broadcast %cst_9 : f32 to vector<1x128xf32>
    %18 = arith.addf %17, %16 : vector<1x128xf32>
    %19 = arith.divf %17, %18 : vector<1x128xf32>
    %20 = vector.extract_strided_slice %13 {offsets = [0, 128], sizes = [1, 128], strides = [1, 1]} : vector<1x512xf32> to vector<1x128xf32>
    %21 = arith.negf %20 : vector<1x128xf32>
    %22 = math.exp %21 : vector<1x128xf32>
    %cst_10 = arith.constant 1.000000e+00 : f32
    %23 = vector.broadcast %cst_10 : f32 to vector<1x128xf32>
    %24 = arith.addf %23, %22 : vector<1x128xf32>
    %25 = arith.divf %23, %24 : vector<1x128xf32>
    %26 = vector.extract_strided_slice %13 {offsets = [0, 256], sizes = [1, 128], strides = [1, 1]} : vector<1x512xf32> to vector<1x128xf32>
    %27 = math.tanh %26 : vector<1x128xf32>
    %28 = vector.extract_strided_slice %13 {offsets = [0, 384], sizes = [1, 128], strides = [1, 1]} : vector<1x512xf32> to vector<1x128xf32>
    %29 = arith.negf %28 : vector<1x128xf32>
    %30 = math.exp %29 : vector<1x128xf32>
    %cst_11 = arith.constant 1.000000e+00 : f32
    %31 = vector.broadcast %cst_11 : f32 to vector<1x128xf32>
    %32 = arith.addf %31, %30 : vector<1x128xf32>
    %33 = arith.divf %31, %32 : vector<1x128xf32>
    %34 = arith.mulf %25, %10 : vector<1x128xf32>
    %35 = arith.mulf %19, %27 : vector<1x128xf32>
    %36 = arith.addf %34, %35 : vector<1x128xf32>
    %37 = math.tanh %36 : vector<1x128xf32>
    %38 = arith.mulf %33, %37 : vector<1x128xf32>
    %39 = vector.extract_strided_slice %8 {offsets = [1, 0], sizes = [1, 512], strides = [1, 1]} : vector<8x512xf32> to vector<1x512xf32>
    %cst_12 = arith.constant dense<0.000000e+00> : vector<1x512xf32>
    %40 = tpu.matmul %38, %0, %cst_12 {dimension_numbers = #tpu.dot_dimension_numbers<[1], [0], [0], [1], [0, 0, 1, 1], [], []>} : vector<1x128xf32>, vector<128x512xf32>, vector<1x512xf32> -> vector<1x512xf32>
    %41 = arith.addf %39, %40 : vector<1x512xf32>
    %42 = vector.extract_strided_slice %41 {offsets = [0, 0], sizes = [1, 128], strides = [1, 1]} : vector<1x512xf32> to vector<1x128xf32>
    %43 = arith.negf %42 : vector<1x128xf32>
    %44 = math.exp %43 : vector<1x128xf32>
    %cst_13 = arith.constant 1.000000e+00 : f32
    %45 = vector.broadcast %cst_13 : f32 to vector<1x128xf32>
    %46 = arith.addf %45, %44 : vector<1x128xf32>
    %47 = arith.divf %45, %46 : vector<1x128xf32>
    %48 = vector.extract_strided_slice %41 {offsets = [0, 128], sizes = [1, 128], strides = [1, 1]} : vector<1x512xf32> to vector<1x128xf32>
    %49 = arith.negf %48 : vector<1x128xf32>
    %50 = math.exp %49 : vector<1x128xf32>
    %cst_14 = arith.constant 1.000000e+00 : f32
    %51 = vector.broadcast %cst_14 : f32 to vector<1x128xf32>
    %52 = arith.addf %51, %50 : vector<1x128xf32>
    %53 = arith.divf %51, %52 : vector<1x128xf32>
    %54 = vector.extract_strided_slice %41 {offsets = [0, 256], sizes = [1, 128], strides = [1, 1]} : vector<1x512xf32> to vector<1x128xf32>
    %55 = math.tanh %54 : vector<1x128xf32>
    %56 = vector.extract_strided_slice %41 {offsets = [0, 384], sizes = [1, 128], strides = [1, 1]} : vector<1x512xf32> to vector<1x128xf32>
    %57 = arith.negf %56 : vector<1x128xf32>
    %58 = math.exp %57 : vector<1x128xf32>
    %cst_15 = arith.constant 1.000000e+00 : f32
    %59 = vector.broadcast %cst_15 : f32 to vector<1x128xf32>
    %60 = arith.addf %59, %58 : vector<1x128xf32>
    %61 = arith.divf %59, %60 : vector<1x128xf32>
    %62 = arith.mulf %53, %36 : vector<1x128xf32>
    %63 = arith.mulf %47, %55 : vector<1x128xf32>
    %64 = arith.addf %62, %63 : vector<1x128xf32>
    %65 = math.tanh %64 : vector<1x128xf32>
    %66 = arith.mulf %61, %65 : vector<1x128xf32>
    %67 = vector.extract_strided_slice %8 {offsets = [2, 0], sizes = [1, 512], strides = [1, 1]} : vector<8x512xf32> to vector<1x512xf32>
    %cst_16 = arith.constant dense<0.000000e+00> : vector<1x512xf32>
    %68 = tpu.matmul %66, %0, %cst_16 {dimension_numbers = #tpu.dot_dimension_numbers<[1], [0], [0], [1], [0, 0, 1, 1], [], []>} : vector<1x128xf32>, vector<128x512xf32>, vector<1x512xf32> -> vector<1x512xf32>
    %69 = arith.addf %67, %68 : vector<1x512xf32>
    %70 = vector.extract_strided_slice %69 {offsets = [0, 0], sizes = [1, 128], strides = [1, 1]} : vector<1x512xf32> to vector<1x128xf32>
    %71 = arith.negf %70 : vector<1x128xf32>
    %72 = math.exp %71 : vector<1x128xf32>
    %cst_17 = arith.constant 1.000000e+00 : f32
    %73 = vector.broadcast %cst_17 : f32 to vector<1x128xf32>
    %74 = arith.addf %73, %72 : vector<1x128xf32>
    %75 = arith.divf %73, %74 : vector<1x128xf32>
    %76 = vector.extract_strided_slice %69 {offsets = [0, 128], sizes = [1, 128], strides = [1, 1]} : vector<1x512xf32> to vector<1x128xf32>
    %77 = arith.negf %76 : vector<1x128xf32>
    %78 = math.exp %77 : vector<1x128xf32>
    %cst_18 = arith.constant 1.000000e+00 : f32
    %79 = vector.broadcast %cst_18 : f32 to vector<1x128xf32>
    %80 = arith.addf %79, %78 : vector<1x128xf32>
    %81 = arith.divf %79, %80 : vector<1x128xf32>
    %82 = vector.extract_strided_slice %69 {offsets = [0, 256], sizes = [1, 128], strides = [1, 1]} : vector<1x512xf32> to vector<1x128xf32>
    %83 = math.tanh %82 : vector<1x128xf32>
    %84 = vector.extract_strided_slice %69 {offsets = [0, 384], sizes = [1, 128], strides = [1, 1]} : vector<1x512xf32> to vector<1x128xf32>
    %85 = arith.negf %84 : vector<1x128xf32>
    %86 = math.exp %85 : vector<1x128xf32>
    %cst_19 = arith.constant 1.000000e+00 : f32
    %87 = vector.broadcast %cst_19 : f32 to vector<1x128xf32>
    %88 = arith.addf %87, %86 : vector<1x128xf32>
    %89 = arith.divf %87, %88 : vector<1x128xf32>
    %90 = arith.mulf %81, %64 : vector<1x128xf32>
    %91 = arith.mulf %75, %83 : vector<1x128xf32>
    %92 = arith.addf %90, %91 : vector<1x128xf32>
    %93 = math.tanh %92 : vector<1x128xf32>
    %94 = arith.mulf %89, %93 : vector<1x128xf32>
    %95 = vector.extract_strided_slice %8 {offsets = [3, 0], sizes = [1, 512], strides = [1, 1]} : vector<8x512xf32> to vector<1x512xf32>
    %cst_20 = arith.constant dense<0.000000e+00> : vector<1x512xf32>
    %96 = tpu.matmul %94, %0, %cst_20 {dimension_numbers = #tpu.dot_dimension_numbers<[1], [0], [0], [1], [0, 0, 1, 1], [], []>} : vector<1x128xf32>, vector<128x512xf32>, vector<1x512xf32> -> vector<1x512xf32>
    %97 = arith.addf %95, %96 : vector<1x512xf32>
    %98 = vector.extract_strided_slice %97 {offsets = [0, 0], sizes = [1, 128], strides = [1, 1]} : vector<1x512xf32> to vector<1x128xf32>
    %99 = arith.negf %98 : vector<1x128xf32>
    %100 = math.exp %99 : vector<1x128xf32>
    %cst_21 = arith.constant 1.000000e+00 : f32
    %101 = vector.broadcast %cst_21 : f32 to vector<1x128xf32>
    %102 = arith.addf %101, %100 : vector<1x128xf32>
    %103 = arith.divf %101, %102 : vector<1x128xf32>
    %104 = vector.extract_strided_slice %97 {offsets = [0, 128], sizes = [1, 128], strides = [1, 1]} : vector<1x512xf32> to vector<1x128xf32>
    %105 = arith.negf %104 : vector<1x128xf32>
    %106 = math.exp %105 : vector<1x128xf32>
    %cst_22 = arith.constant 1.000000e+00 : f32
    %107 = vector.broadcast %cst_22 : f32 to vector<1x128xf32>
    %108 = arith.addf %107, %106 : vector<1x128xf32>
    %109 = arith.divf %107, %108 : vector<1x128xf32>
    %110 = vector.extract_strided_slice %97 {offsets = [0, 256], sizes = [1, 128], strides = [1, 1]} : vector<1x512xf32> to vector<1x128xf32>
    %111 = math.tanh %110 : vector<1x128xf32>
    %112 = vector.extract_strided_slice %97 {offsets = [0, 384], sizes = [1, 128], strides = [1, 1]} : vector<1x512xf32> to vector<1x128xf32>
    %113 = arith.negf %112 : vector<1x128xf32>
    %114 = math.exp %113 : vector<1x128xf32>
    %cst_23 = arith.constant 1.000000e+00 : f32
    %115 = vector.broadcast %cst_23 : f32 to vector<1x128xf32>
    %116 = arith.addf %115, %114 : vector<1x128xf32>
    %117 = arith.divf %115, %116 : vector<1x128xf32>
    %118 = arith.mulf %109, %92 : vector<1x128xf32>
    %119 = arith.mulf %103, %111 : vector<1x128xf32>
    %120 = arith.addf %118, %119 : vector<1x128xf32>
    %121 = math.tanh %120 : vector<1x128xf32>
    %122 = arith.mulf %117, %121 : vector<1x128xf32>
    %123 = vector.extract_strided_slice %8 {offsets = [4, 0], sizes = [1, 512], strides = [1, 1]} : vector<8x512xf32> to vector<1x512xf32>
    %cst_24 = arith.constant dense<0.000000e+00> : vector<1x512xf32>
    %124 = tpu.matmul %122, %0, %cst_24 {dimension_numbers = #tpu.dot_dimension_numbers<[1], [0], [0], [1], [0, 0, 1, 1], [], []>} : vector<1x128xf32>, vector<128x512xf32>, vector<1x512xf32> -> vector<1x512xf32>
    %125 = arith.addf %123, %124 : vector<1x512xf32>
    %126 = vector.extract_strided_slice %125 {offsets = [0, 0], sizes = [1, 128], strides = [1, 1]} : vector<1x512xf32> to vector<1x128xf32>
    %127 = arith.negf %126 : vector<1x128xf32>
    %128 = math.exp %127 : vector<1x128xf32>
    %cst_25 = arith.constant 1.000000e+00 : f32
    %129 = vector.broadcast %cst_25 : f32 to vector<1x128xf32>
    %130 = arith.addf %129, %128 : vector<1x128xf32>
    %131 = arith.divf %129, %130 : vector<1x128xf32>
    %132 = vector.extract_strided_slice %125 {offsets = [0, 128], sizes = [1, 128], strides = [1, 1]} : vector<1x512xf32> to vector<1x128xf32>
    %133 = arith.negf %132 : vector<1x128xf32>
    %134 = math.exp %133 : vector<1x128xf32>
    %cst_26 = arith.constant 1.000000e+00 : f32
    %135 = vector.broadcast %cst_26 : f32 to vector<1x128xf32>
    %136 = arith.addf %135, %134 : vector<1x128xf32>
    %137 = arith.divf %135, %136 : vector<1x128xf32>
    %138 = vector.extract_strided_slice %125 {offsets = [0, 256], sizes = [1, 128], strides = [1, 1]} : vector<1x512xf32> to vector<1x128xf32>
    %139 = math.tanh %138 : vector<1x128xf32>
    %140 = vector.extract_strided_slice %125 {offsets = [0, 384], sizes = [1, 128], strides = [1, 1]} : vector<1x512xf32> to vector<1x128xf32>
    %141 = arith.negf %140 : vector<1x128xf32>
    %142 = math.exp %141 : vector<1x128xf32>
    %cst_27 = arith.constant 1.000000e+00 : f32
    %143 = vector.broadcast %cst_27 : f32 to vector<1x128xf32>
    %144 = arith.addf %143, %142 : vector<1x128xf32>
    %145 = arith.divf %143, %144 : vector<1x128xf32>
    %146 = arith.mulf %137, %120 : vector<1x128xf32>
    %147 = arith.mulf %131, %139 : vector<1x128xf32>
    %148 = arith.addf %146, %147 : vector<1x128xf32>
    %149 = math.tanh %148 : vector<1x128xf32>
    %150 = arith.mulf %145, %149 : vector<1x128xf32>
    %151 = vector.extract_strided_slice %8 {offsets = [5, 0], sizes = [1, 512], strides = [1, 1]} : vector<8x512xf32> to vector<1x512xf32>
    %cst_28 = arith.constant dense<0.000000e+00> : vector<1x512xf32>
    %152 = tpu.matmul %150, %0, %cst_28 {dimension_numbers = #tpu.dot_dimension_numbers<[1], [0], [0], [1], [0, 0, 1, 1], [], []>} : vector<1x128xf32>, vector<128x512xf32>, vector<1x512xf32> -> vector<1x512xf32>
    %153 = arith.addf %151, %152 : vector<1x512xf32>
    %154 = vector.extract_strided_slice %153 {offsets = [0, 0], sizes = [1, 128], strides = [1, 1]} : vector<1x512xf32> to vector<1x128xf32>
    %155 = arith.negf %154 : vector<1x128xf32>
    %156 = math.exp %155 : vector<1x128xf32>
    %cst_29 = arith.constant 1.000000e+00 : f32
    %157 = vector.broadcast %cst_29 : f32 to vector<1x128xf32>
    %158 = arith.addf %157, %156 : vector<1x128xf32>
    %159 = arith.divf %157, %158 : vector<1x128xf32>
    %160 = vector.extract_strided_slice %153 {offsets = [0, 128], sizes = [1, 128], strides = [1, 1]} : vector<1x512xf32> to vector<1x128xf32>
    %161 = arith.negf %160 : vector<1x128xf32>
    %162 = math.exp %161 : vector<1x128xf32>
    %cst_30 = arith.constant 1.000000e+00 : f32
    %163 = vector.broadcast %cst_30 : f32 to vector<1x128xf32>
    %164 = arith.addf %163, %162 : vector<1x128xf32>
    %165 = arith.divf %163, %164 : vector<1x128xf32>
    %166 = vector.extract_strided_slice %153 {offsets = [0, 256], sizes = [1, 128], strides = [1, 1]} : vector<1x512xf32> to vector<1x128xf32>
    %167 = math.tanh %166 : vector<1x128xf32>
    %168 = vector.extract_strided_slice %153 {offsets = [0, 384], sizes = [1, 128], strides = [1, 1]} : vector<1x512xf32> to vector<1x128xf32>
    %169 = arith.negf %168 : vector<1x128xf32>
    %170 = math.exp %169 : vector<1x128xf32>
    %cst_31 = arith.constant 1.000000e+00 : f32
    %171 = vector.broadcast %cst_31 : f32 to vector<1x128xf32>
    %172 = arith.addf %171, %170 : vector<1x128xf32>
    %173 = arith.divf %171, %172 : vector<1x128xf32>
    %174 = arith.mulf %165, %148 : vector<1x128xf32>
    %175 = arith.mulf %159, %167 : vector<1x128xf32>
    %176 = arith.addf %174, %175 : vector<1x128xf32>
    %177 = math.tanh %176 : vector<1x128xf32>
    %178 = arith.mulf %173, %177 : vector<1x128xf32>
    %179 = vector.extract_strided_slice %8 {offsets = [6, 0], sizes = [1, 512], strides = [1, 1]} : vector<8x512xf32> to vector<1x512xf32>
    %cst_32 = arith.constant dense<0.000000e+00> : vector<1x512xf32>
    %180 = tpu.matmul %178, %0, %cst_32 {dimension_numbers = #tpu.dot_dimension_numbers<[1], [0], [0], [1], [0, 0, 1, 1], [], []>} : vector<1x128xf32>, vector<128x512xf32>, vector<1x512xf32> -> vector<1x512xf32>
    %181 = arith.addf %179, %180 : vector<1x512xf32>
    %182 = vector.extract_strided_slice %181 {offsets = [0, 0], sizes = [1, 128], strides = [1, 1]} : vector<1x512xf32> to vector<1x128xf32>
    %183 = arith.negf %182 : vector<1x128xf32>
    %184 = math.exp %183 : vector<1x128xf32>
    %cst_33 = arith.constant 1.000000e+00 : f32
    %185 = vector.broadcast %cst_33 : f32 to vector<1x128xf32>
    %186 = arith.addf %185, %184 : vector<1x128xf32>
    %187 = arith.divf %185, %186 : vector<1x128xf32>
    %188 = vector.extract_strided_slice %181 {offsets = [0, 128], sizes = [1, 128], strides = [1, 1]} : vector<1x512xf32> to vector<1x128xf32>
    %189 = arith.negf %188 : vector<1x128xf32>
    %190 = math.exp %189 : vector<1x128xf32>
    %cst_34 = arith.constant 1.000000e+00 : f32
    %191 = vector.broadcast %cst_34 : f32 to vector<1x128xf32>
    %192 = arith.addf %191, %190 : vector<1x128xf32>
    %193 = arith.divf %191, %192 : vector<1x128xf32>
    %194 = vector.extract_strided_slice %181 {offsets = [0, 256], sizes = [1, 128], strides = [1, 1]} : vector<1x512xf32> to vector<1x128xf32>
    %195 = math.tanh %194 : vector<1x128xf32>
    %196 = vector.extract_strided_slice %181 {offsets = [0, 384], sizes = [1, 128], strides = [1, 1]} : vector<1x512xf32> to vector<1x128xf32>
    %197 = arith.negf %196 : vector<1x128xf32>
    %198 = math.exp %197 : vector<1x128xf32>
    %cst_35 = arith.constant 1.000000e+00 : f32
    %199 = vector.broadcast %cst_35 : f32 to vector<1x128xf32>
    %200 = arith.addf %199, %198 : vector<1x128xf32>
    %201 = arith.divf %199, %200 : vector<1x128xf32>
    %202 = arith.mulf %193, %176 : vector<1x128xf32>
    %203 = arith.mulf %187, %195 : vector<1x128xf32>
    %204 = arith.addf %202, %203 : vector<1x128xf32>
    %205 = math.tanh %204 : vector<1x128xf32>
    %206 = arith.mulf %201, %205 : vector<1x128xf32>
    %207 = vector.extract_strided_slice %8 {offsets = [7, 0], sizes = [1, 512], strides = [1, 1]} : vector<8x512xf32> to vector<1x512xf32>
    %cst_36 = arith.constant dense<0.000000e+00> : vector<1x512xf32>
    %208 = tpu.matmul %206, %0, %cst_36 {dimension_numbers = #tpu.dot_dimension_numbers<[1], [0], [0], [1], [0, 0, 1, 1], [], []>} : vector<1x128xf32>, vector<128x512xf32>, vector<1x512xf32> -> vector<1x512xf32>
    %209 = arith.addf %207, %208 : vector<1x512xf32>
    %210 = vector.extract_strided_slice %209 {offsets = [0, 0], sizes = [1, 128], strides = [1, 1]} : vector<1x512xf32> to vector<1x128xf32>
    %211 = arith.negf %210 : vector<1x128xf32>
    %212 = math.exp %211 : vector<1x128xf32>
    %cst_37 = arith.constant 1.000000e+00 : f32
    %213 = vector.broadcast %cst_37 : f32 to vector<1x128xf32>
    %214 = arith.addf %213, %212 : vector<1x128xf32>
    %215 = arith.divf %213, %214 : vector<1x128xf32>
    %216 = vector.extract_strided_slice %209 {offsets = [0, 128], sizes = [1, 128], strides = [1, 1]} : vector<1x512xf32> to vector<1x128xf32>
    %217 = arith.negf %216 : vector<1x128xf32>
    %218 = math.exp %217 : vector<1x128xf32>
    %cst_38 = arith.constant 1.000000e+00 : f32
    %219 = vector.broadcast %cst_38 : f32 to vector<1x128xf32>
    %220 = arith.addf %219, %218 : vector<1x128xf32>
    %221 = arith.divf %219, %220 : vector<1x128xf32>
    %222 = vector.extract_strided_slice %209 {offsets = [0, 256], sizes = [1, 128], strides = [1, 1]} : vector<1x512xf32> to vector<1x128xf32>
    %223 = math.tanh %222 : vector<1x128xf32>
    %224 = vector.extract_strided_slice %209 {offsets = [0, 384], sizes = [1, 128], strides = [1, 1]} : vector<1x512xf32> to vector<1x128xf32>
    %225 = arith.negf %224 : vector<1x128xf32>
    %226 = math.exp %225 : vector<1x128xf32>
    %cst_39 = arith.constant 1.000000e+00 : f32
    %227 = vector.broadcast %cst_39 : f32 to vector<1x128xf32>
    %228 = arith.addf %227, %226 : vector<1x128xf32>
    %229 = arith.divf %227, %228 : vector<1x128xf32>
    %230 = arith.mulf %221, %204 : vector<1x128xf32>
    %231 = arith.mulf %215, %223 : vector<1x128xf32>
    %232 = arith.addf %230, %231 : vector<1x128xf32>
    %233 = math.tanh %232 : vector<1x128xf32>
    %234 = arith.mulf %229, %233 : vector<1x128xf32>
    %c0_40 = arith.constant 0 : index
    %c0_41 = arith.constant 0 : index
    %235 = vector.load %arg4[%c0_40, %c0_41] : memref<1x128xf32, #tpu.memory_space<vmem>>, vector<1x128xf32>
    %236 = arith.mulf %234, %235 : vector<1x128xf32>
    %cst_42 = arith.constant dense<0.000000e+00> : vector<1xf32>
    %237 = vector.multi_reduction <add>, %236, %cst_42 [1] : vector<1x128xf32> to vector<1xf32>
    %238 = vector.shape_cast %237 : vector<1xf32> to vector<1x1xf32>
    %c0_43 = arith.constant 0 : index
    %c0_44 = arith.constant 0 : index
    %239 = vector.load %arg5[%c0_43, %c0_44] : memref<1x1xf32, #tpu.memory_space<vmem>>, vector<1x1xf32>
    %240 = arith.addf %238, %239 : vector<1x1xf32>
    %c0_45 = arith.constant 0 : index
    %c0_46 = arith.constant 0 : index
    %241 = vector.load %arg6[%c0_45, %c0_46] : memref<1x1xf32, #tpu.memory_space<vmem>>, vector<1x1xf32>
    tpu.vector_store %arg6[%c0_45, %c0_46], %240 {strides = array<i32>} : memref<1x1xf32, #tpu.memory_space<vmem>>, vector<1x1xf32>,
    return
  }
}

</mosaic_0001>

<llo_original>
// kernel: lstm_forward.1
$region0: #{lstm_forward.1}
  #allocation0 [shape = 'u32[]', space=smem, size = 0x4, offset = 0x4, fixed_abs, tag = 'smem constant byte address 0x4 - core index']
  #allocation1 [shape = 'u32[144,128]{1,0:T(1,128)}', space=vmem, size = 0x12000, scoped, tag = 'internal scratch']
  #allocation2 [shape = 'f32[1,1]{1,0:T(1,128)S(1)}', space=vmem, size = 0x200, scoped, tag = 'scoped memory for lstm_forward.1']
  %s0 = inlined_call_operand.vmem [shape: f32[8,1], index: 0, kind: input, shape index: {}]
  %s1 = inlined_call_operand.vmem [shape: f32[1,512], index: 1, kind: input, shape index: {}]
  %s2 = inlined_call_operand.hbm [shape: f32[128,512], index: 2, kind: input, shape index: {}]
  %s3 = inlined_call_operand.vmem [shape: f32[1,512], index: 3, kind: input, shape index: {}]
  %s4 = inlined_call_operand.vmem [shape: f32[1,128], index: 4, kind: input, shape index: {}]
  %s5 = inlined_call_operand.<no memory space> [shape: f32[1,1], index: 5, kind: input, shape index: {}]
  %s6 = inlined_call_operand.hbm [shape: f32[1,1], index: 6, kind: output, shape index: {}]
  %s7 = sld [smem:[#allocation0]]
  $region38: #{lstm_forward.1} parent=0
    _
  %s9 = ssub.s32 1, %s7
  %s10 = scalar_select 0, %s9, %s7
  %v11 = vstv %s5
  %12 = vst [vmem:[#allocation2] sm:$0x1] %v11
  $region1: #{lstm_forward.1} parent=0
    #allocation3 [shape = 'u8[262144]{0}', space=vmem, size = 0x40000, scoped, tag = 'input window, operand 2, single buffered']
    #allocation4 [shape = 's32[1]{0}', space=sflag, size = 0x4, scoped, tag = 'scoped memory for lstm_forward.1']
    #allocation5 [shape = 's32[1]{0}', space=sflag, size = 0x4, scoped, tag = 'scoped memory for lstm_forward.1']
    #allocation6 [shape = 'u8[512]{0}', space=vmem, size = 0x400, scoped, tag = 'output window, operand 0, single buffered']
    %13 = vsyncpa [#allocation4], 0
    %14 = vsyncpa [#allocation5], 0
    // Predicated region
    $region2: #{lstm_forward.1} parent=1 // pred_check
      _
    $region3: #{lstm_forward.1} parent=1 // pred_check_branch
      %16 = sbr.rel (0) target = $region5
    $region4: #{lstm_forward.1} parent=1 // pred_region
      _
    $region5: #{lstm_forward.1} parent=1 // pred_fallthru
      _
    // Predicated region
    $region6: #{lstm_forward.1} parent=1 // pred_check
      _
    $region7: #{lstm_forward.1} parent=1 // pred_check_branch
      %18 = sbr.rel (0) target = $region9
    $region8: #{lstm_forward.1} parent=1 // pred_region
      _
    $region9: #{lstm_forward.1} parent=1 // pred_fallthru
      _
    // Predicated region
    $region10: #{lstm_forward.1} parent=1 // pred_check
      _
    $region11: #{lstm_forward.1} parent=1 // pred_check_branch
      %20 = sbr.rel (0) target = $region13
    $region12: #{lstm_forward.1} parent=1 // pred_region
      %s22 = ssub.s32 8192, 8192
      %23 = vsyncadd [#allocation4], %s22
      %s24 = sshll.u32 [#allocation3], 4
      %s25 = int_to_ptr.vmem [resolvable:$true] %s24
      %30 = dma.hbm_to_vmem [thread:$0]  %s2, 8192, %s25, [#allocation4], 512, 512, 32
    $region13: #{lstm_forward.1} parent=1 // pred_fallthru
      _
    // Predicated region
    $region14: #{lstm_forward.1} parent=1 // pred_check
      _
    $region15: #{lstm_forward.1} parent=1 // pred_check_branch
      %32 = sbr.rel (0) target = $region17
    $region16: #{lstm_forward.1} parent=1 // pred_region
      _
    $region17: #{lstm_forward.1} parent=1 // pred_fallthru
      _
    // Predicated region
    $region18: #{lstm_forward.1} parent=1 // pred_check
      _
    $region19: #{lstm_forward.1} parent=1 // pred_check_branch
      %34 = sbr.rel (0) target = $region21
    $region20: #{lstm_forward.1} parent=1 // pred_region
      _
    $region21: #{lstm_forward.1} parent=1 // pred_fallthru
      _
    // Predicated region
    $region22: #{lstm_forward.1} parent=1 // pred_check
      _
    $region23: #{lstm_forward.1} parent=1 // pred_check_branch
      %36 = sbr.rel (0) target = $region25
    $region24: #{lstm_forward.1} parent=1 // pred_region
      _
    $region25: #{lstm_forward.1} parent=1 // pred_fallthru
      _
    // Predicated region
    $region26: #{lstm_forward.1} parent=1 // pred_check
      _
    $region27: #{lstm_forward.1} parent=1 // pred_check_branch
      %38 = sbr.rel (0) target = $region29
    $region28: #{lstm_forward.1} parent=1 // pred_region
      %39 = dma.done [#allocation4], 8192
    $region29: #{lstm_forward.1} parent=1 // pred_fallthru
      _
    %v40 = vld [vmem:[#allocation3] sm:$0xff]
    %v41 = vld [vmem:[#allocation3 + $0x8] sm:$0xff]
    %v42 = vld [vmem:[#allocation3 + $0x10] sm:$0xff]
    %v43 = vld [vmem:[#allocation3 + $0x18] sm:$0xff]
    %v44 = vld [vmem:[#allocation3 + $0x20] sm:$0xff]
    %v45 = vld [vmem:[#allocation3 + $0x28] sm:$0xff]
    %v46 = vld [vmem:[#allocation3 + $0x30] sm:$0xff]
    %v47 = vld [vmem:[#allocation3 + $0x38] sm:$0xff]
    %v48 = vld [vmem:[#allocation3 + $0x40] sm:$0xff]
    %v49 = vld [vmem:[#allocation3 + $0x48] sm:$0xff]
    %v50 = vld [vmem:[#allocation3 + $0x50] sm:$0xff]
    %v51 = vld [vmem:[#allocation3 + $0x58] sm:$0xff]
    %v52 = vld [vmem:[#allocation3 + $0x60] sm:$0xff]
    %v53 = vld [vmem:[#allocation3 + $0x68] sm:$0xff]
    %v54 = vld [vmem:[#allocation3 + $0x70] sm:$0xff]
    %v55 = vld [vmem:[#allocation3 + $0x78] sm:$0xff]
    %v56 = vld [vmem:[#allocation3 + $0x80] sm:$0xff]
    %v57 = vld [vmem:[#allocation3 + $0x88] sm:$0xff]
    %v58 = vld [vmem:[#allocation3 + $0x90] sm:$0xff]
    %v59 = vld [vmem:[#allocation3 + $0x98] sm:$0xff]
    %v60 = vld [vmem:[#allocation3 + $0xa0] sm:$0xff]
    %v61 = vld [vmem:[#allocation3 + $0xa8] sm:$0xff]
    %v62 = vld [vmem:[#allocation3 + $0xb0] sm:$0xff]
    %v63 = vld [vmem:[#allocation3 + $0xb8] sm:$0xff]
    %v64 = vld [vmem:[#allocation3 + $0xc0] sm:$0xff]
    %v65 = vld [vmem:[#allocation3 + $0xc8] sm:$0xff]
    %v66 = vld [vmem:[#allocation3 + $0xd0] sm:$0xff]
    %v67 = vld [vmem:[#allocation3 + $0xd8] sm:$0xff]
    %v68 = vld [vmem:[#allocation3 + $0xe0] sm:$0xff]
    %v69 = vld [vmem:[#allocation3 + $0xe8] sm:$0xff]
    %v70 = vld [vmem:[#allocation3 + $0xf0] sm:$0xff]
    %v71 = vld [vmem:[#allocation3 + $0xf8] sm:$0xff]
    %v72 = vld [vmem:[#allocation3 + $0x100] sm:$0xff]
    %v73 = vld [vmem:[#allocation3 + $0x108] sm:$0xff]
    %v74 = vld [vmem:[#allocation3 + $0x110] sm:$0xff]
    %v75 = vld [vmem:[#allocation3 + $0x118] sm:$0xff]
    %v76 = vld [vmem:[#allocation3 + $0x120] sm:$0xff]
    %v77 = vld [vmem:[#allocation3 + $0x128] sm:$0xff]
    %v78 = vld [vmem:[#allocation3 + $0x130] sm:$0xff]
    %v79 = vld [vmem:[#allocation3 + $0x138] sm:$0xff]
    %v80 = vld [vmem:[#allocation3 + $0x140] sm:$0xff]
    %v81 = vld [vmem:[#allocation3 + $0x148] sm:$0xff]
    %v82 = vld [vmem:[#allocation3 + $0x150] sm:$0xff]
    %v83 = vld [vmem:[#allocation3 + $0x158] sm:$0xff]
    %v84 = vld [vmem:[#allocation3 + $0x160] sm:$0xff]
    %v85 = vld [vmem:[#allocation3 + $0x168] sm:$0xff]
    %v86 = vld [vmem:[#allocation3 + $0x170] sm:$0xff]
    %v87 = vld [vmem:[#allocation3 + $0x178] sm:$0xff]
    %v88 = vld [vmem:[#allocation3 + $0x180] sm:$0xff]
    %v89 = vld [vmem:[#allocation3 + $0x188] sm:$0xff]
    %v90 = vld [vmem:[#allocation3 + $0x190] sm:$0xff]
    %v91 = vld [vmem:[#allocation3 + $0x198] sm:$0xff]
    %v92 = vld [vmem:[#allocation3 + $0x1a0] sm:$0xff]
    %v93 = vld [vmem:[#allocation3 + $0x1a8] sm:$0xff]
    %v94 = vld [vmem:[#allocation3 + $0x1b0] sm:$0xff]
    %v95 = vld [vmem:[#allocation3 + $0x1b8] sm:$0xff]
    %v96 = vld [vmem:[#allocation3 + $0x1c0] sm:$0xff]
    %v97 = vld [vmem:[#allocation3 + $0x1c8] sm:$0xff]
    %v98 = vld [vmem:[#allocation3 + $0x1d0] sm:$0xff]
    %v99 = vld [vmem:[#allocation3 + $0x1d8] sm:$0xff]
    %v100 = vld [vmem:[#allocation3 + $0x1e0] sm:$0xff]
    %v101 = vld [vmem:[#allocation3 + $0x1e8] sm:$0xff]
    %v102 = vld [vmem:[#allocation3 + $0x1f0] sm:$0xff]
    %v103 = vld [vmem:[#allocation3 + $0x1f8] sm:$0xff]
    %v104 = vld [vmem:[%s0] sm:$0xff]
    %v105 = vld [vmem:[%s1] sm:$0xf]
    %107 = vset.pattern.permute.xlu0 0
    %108 = vperm.xlu0 %107, %v104
    %v109 = vpop.permute.xlu0 %108
    %v112 = vlaneseq
    %v113 = vshrl.u32 %v112, 7
    %v114 = vsub.s32 0, %v113
    %v115 = vrot.slane %v105, %v114
    %v116 = vlaneseq
    %v117 = vshrl.u32 %v116, 7
    %v118 = vsub.s32 1, %v117
    %v119 = vrot.slane %v105, %v118
    %v120 = vlaneseq
    %v121 = vshrl.u32 %v120, 7
    %v122 = vsub.s32 2, %v121
    %v123 = vrot.slane %v105, %v122
    %v124 = vlaneseq
    %v125 = vshrl.u32 %v124, 7
    %v126 = vsub.s32 3, %v125
    %v127 = vrot.slane %v105, %v126
    %v132 = vmul.f32 %v109, %v115
    %v133 = vmul.f32 %v109, %v119
    %v134 = vmul.f32 %v109, %v123
    %v135 = vmul.f32 %v109, %v127
    %v136 = vld [vmem:[%s3] sm:$0xf]
    %v138 = vlaneseq
    %v139 = vshrl.u32 %v138, 7
    %v140 = vsub.s32 0, %v139
    %v141 = vrot.slane %v136, %v140
    %v142 = vlaneseq
    %v143 = vshrl.u32 %v142, 7
    %v144 = vsub.s32 1, %v143
    %v145 = vrot.slane %v136, %v144
    %v146 = vlaneseq
    %v147 = vshrl.u32 %v146, 7
    %v148 = vsub.s32 2, %v147
    %v149 = vrot.slane %v136, %v148
    %v150 = vlaneseq
    %v151 = vshrl.u32 %v150, 7
    %v152 = vsub.s32 3, %v151
    %v153 = vrot.slane %v136, %v152
    %v158 = vadd.f32 %v132, %v141
    %v159 = vadd.f32 %v133, %v145
    %v160 = vadd.f32 %v134, %v149
    %v161 = vadd.f32 %v135, %v153
    %162 = vmatprep.subr.mxu0 %v41
    %163 = vmatpush1.msra.mxu0 %v40
    %164 = vmatprep.subr.mxu0 %v45
    %165 = vmatpush1.msra.mxu0 %v44
    %166 = vmatprep.subr.mxu0 %v49
    %167 = vmatpush1.msra.mxu0 %v48
    %168 = vmatprep.subr.mxu0 %v53
    %169 = vmatpush1.msra.mxu0 %v52
    %170 = vmatprep.subr.mxu0 %v57
    %171 = vmatpush1.msra.mxu0 %v56
    %172 = vmatprep.subr.mxu0 %v61
    %173 = vmatpush1.msra.mxu0 %v60
    %174 = vmatprep.subr.mxu0 %v65
    %175 = vmatpush1.msra.mxu0 %v64
    %176 = vmatprep.subr.mxu0 %v69
    %177 = vmatpush1.msra.mxu0 %v68
    %178 = vmatprep.subr.mxu0 %v73
    %179 = vmatpush1.msra.mxu0 %v72
    %180 = vmatprep.subr.mxu0 %v77
    %181 = vmatpush1.msra.mxu0 %v76
    %182 = vmatprep.subr.mxu0 %v81
    %183 = vmatpush1.msra.mxu0 %v80
    %184 = vmatprep.subr.mxu0 %v85
    %185 = vmatpush1.msra.mxu0 %v84
    %186 = vmatprep.subr.mxu0 %v89
    %187 = vmatpush1.msra.mxu0 %v88
    %188 = vmatprep.subr.mxu0 %v93
    %189 = vmatpush1.msra.mxu0 %v92
    %190 = vmatprep.subr.mxu0 %v97
    %191 = vmatpush1.msra.mxu0 %v96
    %192 = vmatprep.subr.mxu0 %v101
    %193 = vmatpush1.msra.mxu0 %v100
    %194 = vmatprep.subr.mxu0 0.0
    %195 = vmatpush1.msra.mxu0 0.0
    %196 = vmatprep.subr.mxu0 0.0
    %197 = vmatpush1.msra.mxu0 0.0
    %198 = vmatprep.subr.mxu0 0.0
    %199 = vmatpush1.msra.mxu0 0.0
    %200 = vmatprep.subr.mxu0 0.0
    %201 = vmatpush1.msra.mxu0 0.0
    %202 = vmatprep.subr.mxu0 0.0
    %203 = vmatpush1.msra.mxu0 0.0
    %204 = vmatprep.subr.mxu0 0.0
    %205 = vmatpush1.msra.mxu0 0.0
    %206 = vmatprep.subr.mxu0 0.0
    %207 = vmatpush1.msra.mxu0 0.0
    %208 = vmatprep.subr.mxu0 0.0
    %209 = vmatpush1.msra.mxu0 0.0
    %210 = vmatprep.subr.mxu0 0.0
    %211 = vmatpush1.msra.mxu0 0.0
    %212 = vmatprep.subr.mxu0 0.0
    %213 = vmatpush1.msra.mxu0 0.0
    %214 = vmatprep.subr.mxu0 0.0
    %215 = vmatpush1.msra.mxu0 0.0
    %216 = vmatprep.subr.mxu0 0.0
    %217 = vmatpush1.msra.mxu0 0.0
    %218 = vmatprep.subr.mxu0 0.0
    %219 = vmatpush1.msra.mxu0 0.0
    %220 = vmatprep.subr.mxu0 0.0
    %221 = vmatpush1.msra.mxu0 0.0
    %222 = vmatprep.subr.mxu0 0.0
    %223 = vmatpush1.msra.mxu0 0.0
    %224 = vmatprep.subr.mxu0 0.0
    %225 = vmatpush1.msra.mxu0 0.0
    %226 = vmatprep.mubr.f32.mxu0 0.0
    %227 = vmatmul.mubr.f32.gmra.mrb[0].mxu0 0.0
    %v228 = vpop.f32.mrb[0].mxu0
    %v229 = vadd.f32 0.0, %v228
    %v230 = vpop.f32.mrb[0].mxu0
    %v231 = vadd.f32 0.0, %v230
    %232 = vdwg.mxu0
    %233 = vmatprep.subr.mxu0 %v43
    %234 = vmatpush1.msra.mxu0 %v42
    %235 = vmatprep.subr.mxu0 %v47
    %236 = vmatpush1.msra.mxu0 %v46
    %237 = vmatprep.subr.mxu0 %v51
    %238 = vmatpush1.msra.mxu0 %v50
    %239 = vmatprep.subr.mxu0 %v55
    %240 = vmatpush1.msra.mxu0 %v54
    %241 = vmatprep.subr.mxu0 %v59
    %242 = vmatpush1.msra.mxu0 %v58
    %243 = vmatprep.subr.mxu0 %v63
    %244 = vmatpush1.msra.mxu0 %v62
    %245 = vmatprep.subr.mxu0 %v67
    %246 = vmatpush1.msra.mxu0 %v66
    %247 = vmatprep.subr.mxu0 %v71
    %248 = vmatpush1.msra.mxu0 %v70
    %249 = vmatprep.subr.mxu0 %v75
    %250 = vmatpush1.msra.mxu0 %v74
    %251 = vmatprep.subr.mxu0 %v79
    %252 = vmatpush1.msra.mxu0 %v78
    %253 = vmatprep.subr.mxu0 %v83
    %254 = vmatpush1.msra.mxu0 %v82
    %255 = vmatprep.subr.mxu0 %v87
    %256 = vmatpush1.msra.mxu0 %v86
    %257 = vmatprep.subr.mxu0 %v91
    %258 = vmatpush1.msra.mxu0 %v90
    %259 = vmatprep.subr.mxu0 %v95
    %260 = vmatpush1.msra.mxu0 %v94
    %261 = vmatprep.subr.mxu0 %v99
    %262 = vmatpush1.msra.mxu0 %v98
    %263 = vmatprep.subr.mxu0 %v103
    %264 = vmatpush1.msra.mxu0 %v102
    %265 = vmatprep.subr.mxu0 0.0
    %266 = vmatpush1.msra.mxu0 0.0
    %267 = vmatprep.subr.mxu0 0.0
    %268 = vmatpush1.msra.mxu0 0.0
    %269 = vmatprep.subr.mxu0 0.0
    %270 = vmatpush1.msra.mxu0 0.0
    %271 = vmatprep.subr.mxu0 0.0
    %272 = vmatpush1.msra.mxu0 0.0
    %273 = vmatprep.subr.mxu0 0.0
    %274 = vmatpush1.msra.mxu0 0.0
    %275 = vmatprep.subr.mxu0 0.0
    %276 = vmatpush1.msra.mxu0 0.0
    %277 = vmatprep.subr.mxu0 0.0
    %278 = vmatpush1.msra.mxu0 0.0
    %279 = vmatprep.subr.mxu0 0.0
    %280 = vmatpush1.msra.mxu0 0.0
    %281 = vmatprep.subr.mxu0 0.0
    %282 = vmatpush1.msra.mxu0 0.0
    %283 = vmatprep.subr.mxu0 0.0
    %284 = vmatpush1.msra.mxu0 0.0
    %285 = vmatprep.subr.mxu0 0.0
    %286 = vmatpush1.msra.mxu0 0.0
    %287 = vmatprep.subr.mxu0 0.0
    %288 = vmatpush1.msra.mxu0 0.0
    %289 = vmatprep.subr.mxu0 0.0
    %290 = vmatpush1.msra.mxu0 0.0
    %291 = vmatprep.subr.mxu0 0.0
    %292 = vmatpush1.msra.mxu0 0.0
    %293 = vmatprep.subr.mxu0 0.0
    %294 = vmatpush1.msra.mxu0 0.0
    %295 = vmatprep.subr.mxu0 0.0
    %296 = vmatpush1.msra.mxu0 0.0
    %297 = vmatprep.mubr.f32.mxu0 0.0
    %298 = vmatmul.mubr.f32.gmra.mrb[0].mxu0 0.0
    %v299 = vpop.f32.mrb[0].mxu0
    %v300 = vadd.f32 0.0, %v299
    %v301 = vpop.f32.mrb[0].mxu0
    %v302 = vadd.f32 0.0, %v301
    %303 = vdwg.mxu0
    %v304 = vadd.f32 %v158, %v229
    %v305 = vadd.f32 %v159, %v231
    %v306 = vadd.f32 %v160, %v300
    %v307 = vadd.f32 %v161, %v302
    %v308 = vxor.u32 %v304, 2147483648
    %v309 = vmul.f32 %v308, 1.442695
    %v310 = vpow.pop %v309
    %v311 = vadd.f32 %v310, 1.0
    %v312 = vrcp.pop %v311
    %v313 = vmul.f32 1.0, %v312
    %v314 = vxor.u32 %v305, 2147483648
    %v315 = vmul.f32 %v314, 1.442695
    %v316 = vpow.pop %v315
    %v317 = vadd.f32 %v316, 1.0
    %v318 = vrcp.pop %v317
    %v319 = vmul.f32 1.0, %v318
    %v320 = vtanh.pop %v306
    %v321 = vxor.u32 %v307, 2147483648
    %v322 = vmul.f32 %v321, 1.442695
    %v323 = vpow.pop %v322
    %v324 = vadd.f32 %v323, 1.0
    %v325 = vrcp.pop %v324
    %v326 = vmul.f32 1.0, %v325
    %v327 = vmul.f32 %v319, 0.0
    %v328 = vmul.f32 %v313, %v320
    %v329 = vadd.f32 %v327, %v328
    %v330 = vtanh.pop %v329
    %v331 = vmul.f32 %v326, %v330
    %332 = vmatprep.subr.mxu0 %v41
    %333 = vmatpush1.msra.mxu0 %v40
    %334 = vmatprep.subr.mxu0 %v45
    %335 = vmatpush1.msra.mxu0 %v44
    %336 = vmatprep.subr.mxu0 %v49
    %337 = vmatpush1.msra.mxu0 %v48
    %338 = vmatprep.subr.mxu0 %v53
    %339 = vmatpush1.msra.mxu0 %v52
    %340 = vmatprep.subr.mxu0 %v57
    %341 = vmatpush1.msra.mxu0 %v56
    %342 = vmatprep.subr.mxu0 %v61
    %343 = vmatpush1.msra.mxu0 %v60
    %344 = vmatprep.subr.mxu0 %v65
    %345 = vmatpush1.msra.mxu0 %v64
    %346 = vmatprep.subr.mxu0 %v69
    %347 = vmatpush1.msra.mxu0 %v68
    %348 = vmatprep.subr.mxu0 %v73
    %349 = vmatpush1.msra.mxu0 %v72
    %350 = vmatprep.subr.mxu0 %v77
    %351 = vmatpush1.msra.mxu0 %v76
    %352 = vmatprep.subr.mxu0 %v81
    %353 = vmatpush1.msra.mxu0 %v80
    %354 = vmatprep.subr.mxu0 %v85
    %355 = vmatpush1.msra.mxu0 %v84
    %356 = vmatprep.subr.mxu0 %v89
    %357 = vmatpush1.msra.mxu0 %v88
    %358 = vmatprep.subr.mxu0 %v93
    %359 = vmatpush1.msra.mxu0 %v92
    %360 = vmatprep.subr.mxu0 %v97
    %361 = vmatpush1.msra.mxu0 %v96
    %362 = vmatprep.subr.mxu0 %v101
    %363 = vmatpush1.msra.mxu0 %v100
    %364 = vmatprep.subr.mxu0 0.0
    %365 = vmatpush1.msra.mxu0 0.0
    %366 = vmatprep.subr.mxu0 0.0
    %367 = vmatpush1.msra.mxu0 0.0
    %368 = vmatprep.subr.mxu0 0.0
    %369 = vmatpush1.msra.mxu0 0.0
    %370 = vmatprep.subr.mxu0 0.0
    %371 = vmatpush1.msra.mxu0 0.0
    %372 = vmatprep.subr.mxu0 0.0
    %373 = vmatpush1.msra.mxu0 0.0
    %374 = vmatprep.subr.mxu0 0.0
    %375 = vmatpush1.msra.mxu0 0.0
    %376 = vmatprep.subr.mxu0 0.0
    %377 = vmatpush1.msra.mxu0 0.0
    %378 = vmatprep.subr.mxu0 0.0
    %379 = vmatpush1.msra.mxu0 0.0
    %380 = vmatprep.subr.mxu0 0.0
    %381 = vmatpush1.msra.mxu0 0.0
    %382 = vmatprep.subr.mxu0 0.0
    %383 = vmatpush1.msra.mxu0 0.0
    %384 = vmatprep.subr.mxu0 0.0
    %385 = vmatpush1.msra.mxu0 0.0
    %386 = vmatprep.subr.mxu0 0.0
    %387 = vmatpush1.msra.mxu0 0.0
    %388 = vmatprep.subr.mxu0 0.0
    %389 = vmatpush1.msra.mxu0 0.0
    %390 = vmatprep.subr.mxu0 0.0
    %391 = vmatpush1.msra.mxu0 0.0
    %392 = vmatprep.subr.mxu0 0.0
    %393 = vmatpush1.msra.mxu0 0.0
    %394 = vmatprep.subr.mxu0 0.0
    %395 = vmatpush1.msra.mxu0 0.0
    %396 = vmatprep.mubr.f32.mxu0 0.0
    %397 = vmatmul.mubr.f32.gmra.mrb[0].mxu0 %v331
    %v398 = vpop.f32.mrb[0].mxu0
    %v399 = vadd.f32 0.0, %v398
    %v400 = vpop.f32.mrb[0].mxu0
    %v401 = vadd.f32 0.0, %v400
    %402 = vdwg.mxu0
    %403 = vmatprep.subr.mxu0 %v43
    %404 = vmatpush1.msra.mxu0 %v42
    %405 = vmatprep.subr.mxu0 %v47
    %406 = vmatpush1.msra.mxu0 %v46
    %407 = vmatprep.subr.mxu0 %v51
    %408 = vmatpush1.msra.mxu0 %v50
    %409 = vmatprep.subr.mxu0 %v55
    %410 = vmatpush1.msra.mxu0 %v54
    %411 = vmatprep.subr.mxu0 %v59
    %412 = vmatpush1.msra.mxu0 %v58
    %413 = vmatprep.subr.mxu0 %v63
    %414 = vmatpush1.msra.mxu0 %v62
    %415 = vmatprep.subr.mxu0 %v67
    %416 = vmatpush1.msra.mxu0 %v66
    %417 = vmatprep.subr.mxu0 %v71
    %418 = vmatpush1.msra.mxu0 %v70
    %419 = vmatprep.subr.mxu0 %v75
    %420 = vmatpush1.msra.mxu0 %v74
    %421 = vmatprep.subr.mxu0 %v79
    %422 = vmatpush1.msra.mxu0 %v78
    %423 = vmatprep.subr.mxu0 %v83
    %424 = vmatpush1.msra.mxu0 %v82
    %425 = vmatprep.subr.mxu0 %v87
    %426 = vmatpush1.msra.mxu0 %v86
    %427 = vmatprep.subr.mxu0 %v91
    %428 = vmatpush1.msra.mxu0 %v90
    %429 = vmatprep.subr.mxu0 %v95
    %430 = vmatpush1.msra.mxu0 %v94
    %431 = vmatprep.subr.mxu0 %v99
    %432 = vmatpush1.msra.mxu0 %v98
    %433 = vmatprep.subr.mxu0 %v103
    %434 = vmatpush1.msra.mxu0 %v102
    %435 = vmatprep.subr.mxu0 0.0
    %436 = vmatpush1.msra.mxu0 0.0
    %437 = vmatprep.subr.mxu0 0.0
    %438 = vmatpush1.msra.mxu0 0.0
    %439 = vmatprep.subr.mxu0 0.0
    %440 = vmatpush1.msra.mxu0 0.0
    %441 = vmatprep.subr.mxu0 0.0
    %442 = vmatpush1.msra.mxu0 0.0
    %443 = vmatprep.subr.mxu0 0.0
    %444 = vmatpush1.msra.mxu0 0.0
    %445 = vmatprep.subr.mxu0 0.0
    %446 = vmatpush1.msra.mxu0 0.0
    %447 = vmatprep.subr.mxu0 0.0
    %448 = vmatpush1.msra.mxu0 0.0
    %449 = vmatprep.subr.mxu0 0.0
    %450 = vmatpush1.msra.mxu0 0.0
    %451 = vmatprep.subr.mxu0 0.0
    %452 = vmatpush1.msra.mxu0 0.0
    %453 = vmatprep.subr.mxu0 0.0
    %454 = vmatpush1.msra.mxu0 0.0
    %455 = vmatprep.subr.mxu0 0.0
    %456 = vmatpush1.msra.mxu0 0.0
    %457 = vmatprep.subr.mxu0 0.0
    %458 = vmatpush1.msra.mxu0 0.0
    %459 = vmatprep.subr.mxu0 0.0
    %460 = vmatpush1.msra.mxu0 0.0
    %461 = vmatprep.subr.mxu0 0.0
    %462 = vmatpush1.msra.mxu0 0.0
    %463 = vmatprep.subr.mxu0 0.0
    %464 = vmatpush1.msra.mxu0 0.0
    %465 = vmatprep.subr.mxu0 0.0
    %466 = vmatpush1.msra.mxu0 0.0
    %467 = vmatprep.mubr.f32.mxu0 0.0
    %468 = vmatmul.mubr.f32.gmra.mrb[0].mxu0 %v331
    %v469 = vpop.f32.mrb[0].mxu0
    %v470 = vadd.f32 0.0, %v469
    %v471 = vpop.f32.mrb[0].mxu0
    %v472 = vadd.f32 0.0, %v471
    %473 = vdwg.mxu0
    %v478 = vrot.slane %v399, 7
    %v479 = vrot.slane %v401, 7
    %v480 = vrot.slane %v470, 7
    %v481 = vrot.slane %v472, 7
    %v486 = vadd.f32 %v158, %v478
    %v487 = vadd.f32 %v159, %v479
    %v488 = vadd.f32 %v160, %v480
    %v489 = vadd.f32 %v161, %v481
    %v490 = vxor.u32 %v486, 2147483648
    %v491 = vmul.f32 %v490, 1.442695
    %v492 = vpow.pop %v491
    %v493 = vadd.f32 %v492, 1.0
    %v494 = vrcp.pop %v493
    %v495 = vmul.f32 1.0, %v494
    %v496 = vxor.u32 %v487, 2147483648
    %v497 = vmul.f32 %v496, 1.442695
    %v498 = vpow.pop %v497
    %v499 = vadd.f32 %v498, 1.0
    %v500 = vrcp.pop %v499
    %v501 = vmul.f32 1.0, %v500
    %v502 = vtanh.pop %v488
    %v503 = vxor.u32 %v489, 2147483648
    %v504 = vmul.f32 %v503, 1.442695
    %v505 = vpow.pop %v504
    %v506 = vadd.f32 %v505, 1.0
    %v507 = vrcp.pop %v506
    %v508 = vmul.f32 1.0, %v507
    %v510 = vrot.slane %v329, 7
    %v512 = vmul.f32 %v501, %v510
    %v513 = vmul.f32 %v495, %v502
    %v514 = vadd.f32 %v512, %v513
    %v515 = vtanh.pop %v514
    %v516 = vmul.f32 %v508, %v515
    %v518 = vrot.slane %v516, 1
    %520 = vmatprep.subr.mxu0 %v41
    %521 = vmatpush1.msra.mxu0 %v40
    %522 = vmatprep.subr.mxu0 %v45
    %523 = vmatpush1.msra.mxu0 %v44
    %524 = vmatprep.subr.mxu0 %v49
    %525 = vmatpush1.msra.mxu0 %v48
    %526 = vmatprep.subr.mxu0 %v53
    %527 = vmatpush1.msra.mxu0 %v52
    %528 = vmatprep.subr.mxu0 %v57
    %529 = vmatpush1.msra.mxu0 %v56
    %530 = vmatprep.subr.mxu0 %v61
    %531 = vmatpush1.msra.mxu0 %v60
    %532 = vmatprep.subr.mxu0 %v65
    %533 = vmatpush1.msra.mxu0 %v64
    %534 = vmatprep.subr.mxu0 %v69
    %535 = vmatpush1.msra.mxu0 %v68
    %536 = vmatprep.subr.mxu0 %v73
    %537 = vmatpush1.msra.mxu0 %v72
    %538 = vmatprep.subr.mxu0 %v77
    %539 = vmatpush1.msra.mxu0 %v76
    %540 = vmatprep.subr.mxu0 %v81
    %541 = vmatpush1.msra.mxu0 %v80
    %542 = vmatprep.subr.mxu0 %v85
    %543 = vmatpush1.msra.mxu0 %v84
    %544 = vmatprep.subr.mxu0 %v89
    %545 = vmatpush1.msra.mxu0 %v88
    %546 = vmatprep.subr.mxu0 %v93
    %547 = vmatpush1.msra.mxu0 %v92
    %548 = vmatprep.subr.mxu0 %v97
    %549 = vmatpush1.msra.mxu0 %v96
    %550 = vmatprep.subr.mxu0 %v101
    %551 = vmatpush1.msra.mxu0 %v100
    %552 = vmatprep.subr.mxu0 0.0
    %553 = vmatpush1.msra.mxu0 0.0
    %554 = vmatprep.subr.mxu0 0.0
    %555 = vmatpush1.msra.mxu0 0.0
    %556 = vmatprep.subr.mxu0 0.0
    %557 = vmatpush1.msra.mxu0 0.0
    %558 = vmatprep.subr.mxu0 0.0
    %559 = vmatpush1.msra.mxu0 0.0
    %560 = vmatprep.subr.mxu0 0.0
    %561 = vmatpush1.msra.mxu0 0.0
    %562 = vmatprep.subr.mxu0 0.0
    %563 = vmatpush1.msra.mxu0 0.0
    %564 = vmatprep.subr.mxu0 0.0
    %565 = vmatpush1.msra.mxu0 0.0
    %566 = vmatprep.subr.mxu0 0.0
    %567 = vmatpush1.msra.mxu0 0.0
    %568 = vmatprep.subr.mxu0 0.0
    %569 = vmatpush1.msra.mxu0 0.0
    %570 = vmatprep.subr.mxu0 0.0
    %571 = vmatpush1.msra.mxu0 0.0
    %572 = vmatprep.subr.mxu0 0.0
    %573 = vmatpush1.msra.mxu0 0.0
    %574 = vmatprep.subr.mxu0 0.0
    %575 = vmatpush1.msra.mxu0 0.0
    %576 = vmatprep.subr.mxu0 0.0
    %577 = vmatpush1.msra.mxu0 0.0
    %578 = vmatprep.subr.mxu0 0.0
    %579 = vmatpush1.msra.mxu0 0.0
    %580 = vmatprep.subr.mxu0 0.0
    %581 = vmatpush1.msra.mxu0 0.0
    %582 = vmatprep.subr.mxu0 0.0
    %583 = vmatpush1.msra.mxu0 0.0
    %584 = vmatprep.mubr.f32.mxu0 0.0
    %585 = vmatmul.mubr.f32.gmra.mrb[0].mxu0 %v518
    %v586 = vpop.f32.mrb[0].mxu0
    %v587 = vadd.f32 0.0, %v586
    %v588 = vpop.f32.mrb[0].mxu0
    %v589 = vadd.f32 0.0, %v588
    %590 = vdwg.mxu0
    %591 = vmatprep.subr.mxu0 %v43
    %592 = vmatpush1.msra.mxu0 %v42
    %593 = vmatprep.subr.mxu0 %v47
    %594 = vmatpush1.msra.mxu0 %v46
    %595 = vmatprep.subr.mxu0 %v51
    %596 = vmatpush1.msra.mxu0 %v50
    %597 = vmatprep.subr.mxu0 %v55
    %598 = vmatpush1.msra.mxu0 %v54
    %599 = vmatprep.subr.mxu0 %v59
    %600 = vmatpush1.msra.mxu0 %v58
    %601 = vmatprep.subr.mxu0 %v63
    %602 = vmatpush1.msra.mxu0 %v62
    %603 = vmatprep.subr.mxu0 %v67
    %604 = vmatpush1.msra.mxu0 %v66
    %605 = vmatprep.subr.mxu0 %v71
    %606 = vmatpush1.msra.mxu0 %v70
    %607 = vmatprep.subr.mxu0 %v75
    %608 = vmatpush1.msra.mxu0 %v74
    %609 = vmatprep.subr.mxu0 %v79
    %610 = vmatpush1.msra.mxu0 %v78
    %611 = vmatprep.subr.mxu0 %v83
    %612 = vmatpush1.msra.mxu0 %v82
    %613 = vmatprep.subr.mxu0 %v87
    %614 = vmatpush1.msra.mxu0 %v86
    %615 = vmatprep.subr.mxu0 %v91
    %616 = vmatpush1.msra.mxu0 %v90
    %617 = vmatprep.subr.mxu0 %v95
    %618 = vmatpush1.msra.mxu0 %v94
    %619 = vmatprep.subr.mxu0 %v99
    %620 = vmatpush1.msra.mxu0 %v98
    %621 = vmatprep.subr.mxu0 %v103
    %622 = vmatpush1.msra.mxu0 %v102
    %623 = vmatprep.subr.mxu0 0.0
    %624 = vmatpush1.msra.mxu0 0.0
    %625 = vmatprep.subr.mxu0 0.0
    %626 = vmatpush1.msra.mxu0 0.0
    %627 = vmatprep.subr.mxu0 0.0
    %628 = vmatpush1.msra.mxu0 0.0
    %629 = vmatprep.subr.mxu0 0.0
    %630 = vmatpush1.msra.mxu0 0.0
    %631 = vmatprep.subr.mxu0 0.0
    %632 = vmatpush1.msra.mxu0 0.0
    %633 = vmatprep.subr.mxu0 0.0
    %634 = vmatpush1.msra.mxu0 0.0
    %635 = vmatprep.subr.mxu0 0.0
    %636 = vmatpush1.msra.mxu0 0.0
    %637 = vmatprep.subr.mxu0 0.0
    %638 = vmatpush1.msra.mxu0 0.0
    %639 = vmatprep.subr.mxu0 0.0
    %640 = vmatpush1.msra.mxu0 0.0
    %641 = vmatprep.subr.mxu0 0.0
    %642 = vmatpush1.msra.mxu0 0.0
    %643 = vmatprep.subr.mxu0 0.0
    %644 = vmatpush1.msra.mxu0 0.0
    %645 = vmatprep.subr.mxu0 0.0
    %646 = vmatpush1.msra.mxu0 0.0
    %647 = vmatprep.subr.mxu0 0.0
    %648 = vmatpush1.msra.mxu0 0.0
    %649 = vmatprep.subr.mxu0 0.0
    %650 = vmatpush1.msra.mxu0 0.0
    %651 = vmatprep.subr.mxu0 0.0
    %652 = vmatpush1.msra.mxu0 0.0
    %653 = vmatprep.subr.mxu0 0.0
    %654 = vmatpush1.msra.mxu0 0.0
    %655 = vmatprep.mubr.f32.mxu0 0.0
    %656 = vmatmul.mubr.f32.gmra.mrb[0].mxu0 %v518
    %v657 = vpop.f32.mrb[0].mxu0
    %v658 = vadd.f32 0.0, %v657
    %v659 = vpop.f32.mrb[0].mxu0
    %v660 = vadd.f32 0.0, %v659
    %661 = vdwg.mxu0
    %v666 = vrot.slane %v587, 6
    %v667 = vrot.slane %v589, 6
    %v668 = vrot.slane %v658, 6
    %v669 = vrot.slane %v660, 6
    %v674 = vadd.f32 %v158, %v666
    %v675 = vadd.f32 %v159, %v667
    %v676 = vadd.f32 %v160, %v668
    %v677 = vadd.f32 %v161, %v669
    %v678 = vxor.u32 %v674, 2147483648
    %v679 = vmul.f32 %v678, 1.442695
    %v680 = vpow.pop %v679
    %v681 = vadd.f32 %v680, 1.0
    %v682 = vrcp.pop %v681
    %v683 = vmul.f32 1.0, %v682
    %v684 = vxor.u32 %v675, 2147483648
    %v685 = vmul.f32 %v684, 1.442695
    %v686 = vpow.pop %v685
    %v687 = vadd.f32 %v686, 1.0
    %v688 = vrcp.pop %v687
    %v689 = vmul.f32 1.0, %v688
    %v690 = vtanh.pop %v676
    %v691 = vxor.u32 %v677, 2147483648
    %v692 = vmul.f32 %v691, 1.442695
    %v693 = vpow.pop %v692
    %v694 = vadd.f32 %v693, 1.0
    %v695 = vrcp.pop %v694
    %v696 = vmul.f32 1.0, %v695
    %v698 = vrot.slane %v514, 7
    %v700 = vmul.f32 %v689, %v698
    %v701 = vmul.f32 %v683, %v690
    %v702 = vadd.f32 %v700, %v701
    %v703 = vtanh.pop %v702
    %v704 = vmul.f32 %v696, %v703
    %v706 = vrot.slane %v704, 2
    %708 = vmatprep.subr.mxu0 %v41
    %709 = vmatpush1.msra.mxu0 %v40
    %710 = vmatprep.subr.mxu0 %v45
    %711 = vmatpush1.msra.mxu0 %v44
    %712 = vmatprep.subr.mxu0 %v49
    %713 = vmatpush1.msra.mxu0 %v48
    %714 = vmatprep.subr.mxu0 %v53
    %715 = vmatpush1.msra.mxu0 %v52
    %716 = vmatprep.subr.mxu0 %v57
    %717 = vmatpush1.msra.mxu0 %v56
    %718 = vmatprep.subr.mxu0 %v61
    %719 = vmatpush1.msra.mxu0 %v60
    %720 = vmatprep.subr.mxu0 %v65
    %721 = vmatpush1.msra.mxu0 %v64
    %722 = vmatprep.subr.mxu0 %v69
    %723 = vmatpush1.msra.mxu0 %v68
    %724 = vmatprep.subr.mxu0 %v73
    %725 = vmatpush1.msra.mxu0 %v72
    %726 = vmatprep.subr.mxu0 %v77
    %727 = vmatpush1.msra.mxu0 %v76
    %728 = vmatprep.subr.mxu0 %v81
    %729 = vmatpush1.msra.mxu0 %v80
    %730 = vmatprep.subr.mxu0 %v85
    %731 = vmatpush1.msra.mxu0 %v84
    %732 = vmatprep.subr.mxu0 %v89
    %733 = vmatpush1.msra.mxu0 %v88
    %734 = vmatprep.subr.mxu0 %v93
    %735 = vmatpush1.msra.mxu0 %v92
    %736 = vmatprep.subr.mxu0 %v97
    %737 = vmatpush1.msra.mxu0 %v96
    %738 = vmatprep.subr.mxu0 %v101
    %739 = vmatpush1.msra.mxu0 %v100
    %740 = vmatprep.subr.mxu0 0.0
    %741 = vmatpush1.msra.mxu0 0.0
    %742 = vmatprep.subr.mxu0 0.0
    %743 = vmatpush1.msra.mxu0 0.0
    %744 = vmatprep.subr.mxu0 0.0
    %745 = vmatpush1.msra.mxu0 0.0
    %746 = vmatprep.subr.mxu0 0.0
    %747 = vmatpush1.msra.mxu0 0.0
    %748 = vmatprep.subr.mxu0 0.0
    %749 = vmatpush1.msra.mxu0 0.0
    %750 = vmatprep.subr.mxu0 0.0
    %751 = vmatpush1.msra.mxu0 0.0
    %752 = vmatprep.subr.mxu0 0.0
    %753 = vmatpush1.msra.mxu0 0.0
    %754 = vmatprep.subr.mxu0 0.0
    %755 = vmatpush1.msra.mxu0 0.0
    %756 = vmatprep.subr.mxu0 0.0
    %757 = vmatpush1.msra.mxu0 0.0
    %758 = vmatprep.subr.mxu0 0.0
    %759 = vmatpush1.msra.mxu0 0.0
    %760 = vmatprep.subr.mxu0 0.0
    %761 = vmatpush1.msra.mxu0 0.0
    %762 = vmatprep.subr.mxu0 0.0
    %763 = vmatpush1.msra.mxu0 0.0
    %764 = vmatprep.subr.mxu0 0.0
    %765 = vmatpush1.msra.mxu0 0.0
    %766 = vmatprep.subr.mxu0 0.0
    %767 = vmatpush1.msra.mxu0 0.0
    %768 = vmatprep.subr.mxu0 0.0
    %769 = vmatpush1.msra.mxu0 0.0
    %770 = vmatprep.subr.mxu0 0.0
    %771 = vmatpush1.msra.mxu0 0.0
    %772 = vmatprep.mubr.f32.mxu0 0.0
    %773 = vmatmul.mubr.f32.gmra.mrb[0].mxu0 %v706
    %v774 = vpop.f32.mrb[0].mxu0
    %v775 = vadd.f32 0.0, %v774
    %v776 = vpop.f32.mrb[0].mxu0
    %v777 = vadd.f32 0.0, %v776
    %778 = vdwg.mxu0
    %779 = vmatprep.subr.mxu0 %v43
    %780 = vmatpush1.msra.mxu0 %v42
    %781 = vmatprep.subr.mxu0 %v47
    %782 = vmatpush1.msra.mxu0 %v46
    %783 = vmatprep.subr.mxu0 %v51
    %784 = vmatpush1.msra.mxu0 %v50
    %785 = vmatprep.subr.mxu0 %v55
    %786 = vmatpush1.msra.mxu0 %v54
    %787 = vmatprep.subr.mxu0 %v59
    %788 = vmatpush1.msra.mxu0 %v58
    %789 = vmatprep.subr.mxu0 %v63
    %790 = vmatpush1.msra.mxu0 %v62
    %791 = vmatprep.subr.mxu0 %v67
    %792 = vmatpush1.msra.mxu0 %v66
    %793 = vmatprep.subr.mxu0 %v71
    %794 = vmatpush1.msra.mxu0 %v70
    %795 = vmatprep.subr.mxu0 %v75
    %796 = vmatpush1.msra.mxu0 %v74
    %797 = vmatprep.subr.mxu0 %v79
    %798 = vmatpush1.msra.mxu0 %v78
    %799 = vmatprep.subr.mxu0 %v83
    %800 = vmatpush1.msra.mxu0 %v82
    %801 = vmatprep.subr.mxu0 %v87
    %802 = vmatpush1.msra.mxu0 %v86
    %803 = vmatprep.subr.mxu0 %v91
    %804 = vmatpush1.msra.mxu0 %v90
    %805 = vmatprep.subr.mxu0 %v95
    %806 = vmatpush1.msra.mxu0 %v94
    %807 = vmatprep.subr.mxu0 %v99
    %808 = vmatpush1.msra.mxu0 %v98
    %809 = vmatprep.subr.mxu0 %v103
    %810 = vmatpush1.msra.mxu0 %v102
    %811 = vmatprep.subr.mxu0 0.0
    %812 = vmatpush1.msra.mxu0 0.0
    %813 = vmatprep.subr.mxu0 0.0
    %814 = vmatpush1.msra.mxu0 0.0
    %815 = vmatprep.subr.mxu0 0.0
    %816 = vmatpush1.msra.mxu0 0.0
    %817 = vmatprep.subr.mxu0 0.0
    %818 = vmatpush1.msra.mxu0 0.0
    %819 = vmatprep.subr.mxu0 0.0
    %820 = vmatpush1.msra.mxu0 0.0
    %821 = vmatprep.subr.mxu0 0.0
    %822 = vmatpush1.msra.mxu0 0.0
    %823 = vmatprep.subr.mxu0 0.0
    %824 = vmatpush1.msra.mxu0 0.0
    %825 = vmatprep.subr.mxu0 0.0
    %826 = vmatpush1.msra.mxu0 0.0
    %827 = vmatprep.subr.mxu0 0.0
    %828 = vmatpush1.msra.mxu0 0.0
    %829 = vmatprep.subr.mxu0 0.0
    %830 = vmatpush1.msra.mxu0 0.0
    %831 = vmatprep.subr.mxu0 0.0
    %832 = vmatpush1.msra.mxu0 0.0
    %833 = vmatprep.subr.mxu0 0.0
    %834 = vmatpush1.msra.mxu0 0.0
    %835 = vmatprep.subr.mxu0 0.0
    %836 = vmatpush1.msra.mxu0 0.0
    %837 = vmatprep.subr.mxu0 0.0
    %838 = vmatpush1.msra.mxu0 0.0
    %839 = vmatprep.subr.mxu0 0.0
    %840 = vmatpush1.msra.mxu0 0.0
    %841 = vmatprep.subr.mxu0 0.0
    %842 = vmatpush1.msra.mxu0 0.0
    %843 = vmatprep.mubr.f32.mxu0 0.0
    %844 = vmatmul.mubr.f32.gmra.mrb[0].mxu0 %v706
    %v845 = vpop.f32.mrb[0].mxu0
    %v846 = vadd.f32 0.0, %v845
    %v847 = vpop.f32.mrb[0].mxu0
    %v848 = vadd.f32 0.0, %v847
    %849 = vdwg.mxu0
    %v854 = vrot.slane %v775, 5
    %v855 = vrot.slane %v777, 5
    %v856 = vrot.slane %v846, 5
    %v857 = vrot.slane %v848, 5
    %v862 = vadd.f32 %v158, %v854
    %v863 = vadd.f32 %v159, %v855
    %v864 = vadd.f32 %v160, %v856
    %v865 = vadd.f32 %v161, %v857
    %v866 = vxor.u32 %v862, 2147483648
    %v867 = vmul.f32 %v866, 1.442695
    %v868 = vpow.pop %v867
    %v869 = vadd.f32 %v868, 1.0
    %v870 = vrcp.pop %v869
    %v871 = vmul.f32 1.0, %v870
    %v872 = vxor.u32 %v863, 2147483648
    %v873 = vmul.f32 %v872, 1.442695
    %v874 = vpow.pop %v873
    %v875 = vadd.f32 %v874, 1.0
    %v876 = vrcp.pop %v875
    %v877 = vmul.f32 1.0, %v876
    %v878 = vtanh.pop %v864
    %v879 = vxor.u32 %v865, 2147483648
    %v880 = vmul.f32 %v879, 1.442695
    %v881 = vpow.pop %v880
    %v882 = vadd.f32 %v881, 1.0
    %v883 = vrcp.pop %v882
    %v884 = vmul.f32 1.0, %v883
    %v886 = vrot.slane %v702, 7
    %v888 = vmul.f32 %v877, %v886
    %v889 = vmul.f32 %v871, %v878
    %v890 = vadd.f32 %v888, %v889
    %v891 = vtanh.pop %v890
    %v892 = vmul.f32 %v884, %v891
    %v894 = vrot.slane %v892, 3
    %896 = vmatprep.subr.mxu0 %v41
    %897 = vmatpush1.msra.mxu0 %v40
    %898 = vmatprep.subr.mxu0 %v45
    %899 = vmatpush1.msra.mxu0 %v44
    %900 = vmatprep.subr.mxu0 %v49
    %901 = vmatpush1.msra.mxu0 %v48
    %902 = vmatprep.subr.mxu0 %v53
    %903 = vmatpush1.msra.mxu0 %v52
    %904 = vmatprep.subr.mxu0 %v57
    %905 = vmatpush1.msra.mxu0 %v56
    %906 = vmatprep.subr.mxu0 %v61
    %907 = vmatpush1.msra.mxu0 %v60
    %908 = vmatprep.subr.mxu0 %v65
    %909 = vmatpush1.msra.mxu0 %v64
    %910 = vmatprep.subr.mxu0 %v69
    %911 = vmatpush1.msra.mxu0 %v68
    %912 = vmatprep.subr.mxu0 %v73
    %913 = vmatpush1.msra.mxu0 %v72
    %914 = vmatprep.subr.mxu0 %v77
    %915 = vmatpush1.msra.mxu0 %v76
    %916 = vmatprep.subr.mxu0 %v81
    %917 = vmatpush1.msra.mxu0 %v80
    %918 = vmatprep.subr.mxu0 %v85
    %919 = vmatpush1.msra.mxu0 %v84
    %920 = vmatprep.subr.mxu0 %v89
    %921 = vmatpush1.msra.mxu0 %v88
    %922 = vmatprep.subr.mxu0 %v93
    %923 = vmatpush1.msra.mxu0 %v92
    %924 = vmatprep.subr.mxu0 %v97
    %925 = vmatpush1.msra.mxu0 %v96
    %926 = vmatprep.subr.mxu0 %v101
    %927 = vmatpush1.msra.mxu0 %v100
    %928 = vmatprep.subr.mxu0 0.0
    %929 = vmatpush1.msra.mxu0 0.0
    %930 = vmatprep.subr.mxu0 0.0
    %931 = vmatpush1.msra.mxu0 0.0
    %932 = vmatprep.subr.mxu0 0.0
    %933 = vmatpush1.msra.mxu0 0.0
    %934 = vmatprep.subr.mxu0 0.0
    %935 = vmatpush1.msra.mxu0 0.0
    %936 = vmatprep.subr.mxu0 0.0
    %937 = vmatpush1.msra.mxu0 0.0
    %938 = vmatprep.subr.mxu0 0.0
    %939 = vmatpush1.msra.mxu0 0.0
    %940 = vmatprep.subr.mxu0 0.0
    %941 = vmatpush1.msra.mxu0 0.0
    %942 = vmatprep.subr.mxu0 0.0
    %943 = vmatpush1.msra.mxu0 0.0
    %944 = vmatprep.subr.mxu0 0.0
    %945 = vmatpush1.msra.mxu0 0.0
    %946 = vmatprep.subr.mxu0 0.0
    %947 = vmatpush1.msra.mxu0 0.0
    %948 = vmatprep.subr.mxu0 0.0
    %949 = vmatpush1.msra.mxu0 0.0
    %950 = vmatprep.subr.mxu0 0.0
    %951 = vmatpush1.msra.mxu0 0.0
    %952 = vmatprep.subr.mxu0 0.0
    %953 = vmatpush1.msra.mxu0 0.0
    %954 = vmatprep.subr.mxu0 0.0
    %955 = vmatpush1.msra.mxu0 0.0
    %956 = vmatprep.subr.mxu0 0.0
    %957 = vmatpush1.msra.mxu0 0.0
    %958 = vmatprep.subr.mxu0 0.0
    %959 = vmatpush1.msra.mxu0 0.0
    %960 = vmatprep.mubr.f32.mxu0 0.0
    %961 = vmatmul.mubr.f32.gmra.mrb[0].mxu0 %v894
    %v962 = vpop.f32.mrb[0].mxu0
    %v963 = vadd.f32 0.0, %v962
    %v964 = vpop.f32.mrb[0].mxu0
    %v965 = vadd.f32 0.0, %v964
    %966 = vdwg.mxu0
    %967 = vmatprep.subr.mxu0 %v43
    %968 = vmatpush1.msra.mxu0 %v42
    %969 = vmatprep.subr.mxu0 %v47
    %970 = vmatpush1.msra.mxu0 %v46
    %971 = vmatprep.subr.mxu0 %v51
    %972 = vmatpush1.msra.mxu0 %v50
    %973 = vmatprep.subr.mxu0 %v55
    %974 = vmatpush1.msra.mxu0 %v54
    %975 = vmatprep.subr.mxu0 %v59
    %976 = vmatpush1.msra.mxu0 %v58
    %977 = vmatprep.subr.mxu0 %v63
    %978 = vmatpush1.msra.mxu0 %v62
    %979 = vmatprep.subr.mxu0 %v67
    %980 = vmatpush1.msra.mxu0 %v66
    %981 = vmatprep.subr.mxu0 %v71
    %982 = vmatpush1.msra.mxu0 %v70
    %983 = vmatprep.subr.mxu0 %v75
    %984 = vmatpush1.msra.mxu0 %v74
    %985 = vmatprep.subr.mxu0 %v79
    %986 = vmatpush1.msra.mxu0 %v78
    %987 = vmatprep.subr.mxu0 %v83
    %988 = vmatpush1.msra.mxu0 %v82
    %989 = vmatprep.subr.mxu0 %v87
    %990 = vmatpush1.msra.mxu0 %v86
    %991 = vmatprep.subr.mxu0 %v91
    %992 = vmatpush1.msra.mxu0 %v90
    %993 = vmatprep.subr.mxu0 %v95
    %994 = vmatpush1.msra.mxu0 %v94
    %995 = vmatprep.subr.mxu0 %v99
    %996 = vmatpush1.msra.mxu0 %v98
    %997 = vmatprep.subr.mxu0 %v103
    %998 = vmatpush1.msra.mxu0 %v102
    %999 = vmatprep.subr.mxu0 0.0
    %1000 = vmatpush1.msra.mxu0 0.0
    %1001 = vmatprep.subr.mxu0 0.0
    %1002 = vmatpush1.msra.mxu0 0.0
    %1003 = vmatprep.subr.mxu0 0.0
    %1004 = vmatpush1.msra.mxu0 0.0
    %1005 = vmatprep.subr.mxu0 0.0
    %1006 = vmatpush1.msra.mxu0 0.0
    %1007 = vmatprep.subr.mxu0 0.0
    %1008 = vmatpush1.msra.mxu0 0.0
    %1009 = vmatprep.subr.mxu0 0.0
    %1010 = vmatpush1.msra.mxu0 0.0
    %1011 = vmatprep.subr.mxu0 0.0
    %1012 = vmatpush1.msra.mxu0 0.0
    %1013 = vmatprep.subr.mxu0 0.0
    %1014 = vmatpush1.msra.mxu0 0.0
    %1015 = vmatprep.subr.mxu0 0.0
    %1016 = vmatpush1.msra.mxu0 0.0
    %1017 = vmatprep.subr.mxu0 0.0
    %1018 = vmatpush1.msra.mxu0 0.0
    %1019 = vmatprep.subr.mxu0 0.0
    %1020 = vmatpush1.msra.mxu0 0.0
    %1021 = vmatprep.subr.mxu0 0.0
    %1022 = vmatpush1.msra.mxu0 0.0
    %1023 = vmatprep.subr.mxu0 0.0
    %1024 = vmatpush1.msra.mxu0 0.0
    %1025 = vmatprep.subr.mxu0 0.0
    %1026 = vmatpush1.msra.mxu0 0.0
    %1027 = vmatprep.subr.mxu0 0.0
    %1028 = vmatpush1.msra.mxu0 0.0
    %1029 = vmatprep.subr.mxu0 0.0
    %1030 = vmatpush1.msra.mxu0 0.0
    %1031 = vmatprep.mubr.f32.mxu0 0.0
    %1032 = vmatmul.mubr.f32.gmra.mrb[0].mxu0 %v894
    %v1033 = vpop.f32.mrb[0].mxu0
    %v1034 = vadd.f32 0.0, %v1033
    %v1035 = vpop.f32.mrb[0].mxu0
    %v1036 = vadd.f32 0.0, %v1035
    %1037 = vdwg.mxu0
    %v1042 = vrot.slane %v963, 4
    %v1043 = vrot.slane %v965, 4
    %v1044 = vrot.slane %v1034, 4
    %v1045 = vrot.slane %v1036, 4
    %v1050 = vadd.f32 %v158, %v1042
    %v1051 = vadd.f32 %v159, %v1043
    %v1052 = vadd.f32 %v160, %v1044
    %v1053 = vadd.f32 %v161, %v1045
    %v1054 = vxor.u32 %v1050, 2147483648
    %v1055 = vmul.f32 %v1054, 1.442695
    %v1056 = vpow.pop %v1055
    %v1057 = vadd.f32 %v1056, 1.0
    %v1058 = vrcp.pop %v1057
    %v1059 = vmul.f32 1.0, %v1058
    %v1060 = vxor.u32 %v1051, 2147483648
    %v1061 = vmul.f32 %v1060, 1.442695
    %v1062 = vpow.pop %v1061
    %v1063 = vadd.f32 %v1062, 1.0
    %v1064 = vrcp.pop %v1063
    %v1065 = vmul.f32 1.0, %v1064
    %v1066 = vtanh.pop %v1052
    %v1067 = vxor.u32 %v1053, 2147483648
    %v1068 = vmul.f32 %v1067, 1.442695
    %v1069 = vpow.pop %v1068
    %v1070 = vadd.f32 %v1069, 1.0
    %v1071 = vrcp.pop %v1070
    %v1072 = vmul.f32 1.0, %v1071
    %v1074 = vrot.slane %v890, 7
    %v1076 = vmul.f32 %v1065, %v1074
    %v1077 = vmul.f32 %v1059, %v1066
    %v1078 = vadd.f32 %v1076, %v1077
    %v1079 = vtanh.pop %v1078
    %v1080 = vmul.f32 %v1072, %v1079
    %v1082 = vrot.slane %v1080, 4
    %1084 = vmatprep.subr.mxu0 %v41
    %1085 = vmatpush1.msra.mxu0 %v40
    %1086 = vmatprep.subr.mxu0 %v45
    %1087 = vmatpush1.msra.mxu0 %v44
    %1088 = vmatprep.subr.mxu0 %v49
    %1089 = vmatpush1.msra.mxu0 %v48
    %1090 = vmatprep.subr.mxu0 %v53
    %1091 = vmatpush1.msra.mxu0 %v52
    %1092 = vmatprep.subr.mxu0 %v57
    %1093 = vmatpush1.msra.mxu0 %v56
    %1094 = vmatprep.subr.mxu0 %v61
    %1095 = vmatpush1.msra.mxu0 %v60
    %1096 = vmatprep.subr.mxu0 %v65
    %1097 = vmatpush1.msra.mxu0 %v64
    %1098 = vmatprep.subr.mxu0 %v69
    %1099 = vmatpush1.msra.mxu0 %v68
    %1100 = vmatprep.subr.mxu0 %v73
    %1101 = vmatpush1.msra.mxu0 %v72
    %1102 = vmatprep.subr.mxu0 %v77
    %1103 = vmatpush1.msra.mxu0 %v76
    %1104 = vmatprep.subr.mxu0 %v81
    %1105 = vmatpush1.msra.mxu0 %v80
    %1106 = vmatprep.subr.mxu0 %v85
    %1107 = vmatpush1.msra.mxu0 %v84
    %1108 = vmatprep.subr.mxu0 %v89
    %1109 = vmatpush1.msra.mxu0 %v88
    %1110 = vmatprep.subr.mxu0 %v93
    %1111 = vmatpush1.msra.mxu0 %v92
    %1112 = vmatprep.subr.mxu0 %v97
    %1113 = vmatpush1.msra.mxu0 %v96
    %1114 = vmatprep.subr.mxu0 %v101
    %1115 = vmatpush1.msra.mxu0 %v100
    %1116 = vmatprep.subr.mxu0 0.0
    %1117 = vmatpush1.msra.mxu0 0.0
    %1118 = vmatprep.subr.mxu0 0.0
    %1119 = vmatpush1.msra.mxu0 0.0
    %1120 = vmatprep.subr.mxu0 0.0
    %1121 = vmatpush1.msra.mxu0 0.0
    %1122 = vmatprep.subr.mxu0 0.0
    %1123 = vmatpush1.msra.mxu0 0.0
    %1124 = vmatprep.subr.mxu0 0.0
    %1125 = vmatpush1.msra.mxu0 0.0
    %1126 = vmatprep.subr.mxu0 0.0
    %1127 = vmatpush1.msra.mxu0 0.0
    %1128 = vmatprep.subr.mxu0 0.0
    %1129 = vmatpush1.msra.mxu0 0.0
    %1130 = vmatprep.subr.mxu0 0.0
    %1131 = vmatpush1.msra.mxu0 0.0
    %1132 = vmatprep.subr.mxu0 0.0
    %1133 = vmatpush1.msra.mxu0 0.0
    %1134 = vmatprep.subr.mxu0 0.0
    %1135 = vmatpush1.msra.mxu0 0.0
    %1136 = vmatprep.subr.mxu0 0.0
    %1137 = vmatpush1.msra.mxu0 0.0
    %1138 = vmatprep.subr.mxu0 0.0
    %1139 = vmatpush1.msra.mxu0 0.0
    %1140 = vmatprep.subr.mxu0 0.0
    %1141 = vmatpush1.msra.mxu0 0.0
    %1142 = vmatprep.subr.mxu0 0.0
    %1143 = vmatpush1.msra.mxu0 0.0
    %1144 = vmatprep.subr.mxu0 0.0
    %1145 = vmatpush1.msra.mxu0 0.0
    %1146 = vmatprep.subr.mxu0 0.0
    %1147 = vmatpush1.msra.mxu0 0.0
    %1148 = vmatprep.mubr.f32.mxu0 0.0
    %1149 = vmatmul.mubr.f32.gmra.mrb[0].mxu0 %v1082
    %v1150 = vpop.f32.mrb[0].mxu0
    %v1151 = vadd.f32 0.0, %v1150
    %v1152 = vpop.f32.mrb[0].mxu0
    %v1153 = vadd.f32 0.0, %v1152
    %1154 = vdwg.mxu0
    %1155 = vmatprep.subr.mxu0 %v43
    %1156 = vmatpush1.msra.mxu0 %v42
    %1157 = vmatprep.subr.mxu0 %v47
    %1158 = vmatpush1.msra.mxu0 %v46
    %1159 = vmatprep.subr.mxu0 %v51
    %1160 = vmatpush1.msra.mxu0 %v50
    %1161 = vmatprep.subr.mxu0 %v55
    %1162 = vmatpush1.msra.mxu0 %v54
    %1163 = vmatprep.subr.mxu0 %v59
    %1164 = vmatpush1.msra.mxu0 %v58
    %1165 = vmatprep.subr.mxu0 %v63
    %1166 = vmatpush1.msra.mxu0 %v62
    %1167 = vmatprep.subr.mxu0 %v67
    %1168 = vmatpush1.msra.mxu0 %v66
    %1169 = vmatprep.subr.mxu0 %v71
    %1170 = vmatpush1.msra.mxu0 %v70
    %1171 = vmatprep.subr.mxu0 %v75
    %1172 = vmatpush1.msra.mxu0 %v74
    %1173 = vmatprep.subr.mxu0 %v79
    %1174 = vmatpush1.msra.mxu0 %v78
    %1175 = vmatprep.subr.mxu0 %v83
    %1176 = vmatpush1.msra.mxu0 %v82
    %1177 = vmatprep.subr.mxu0 %v87
    %1178 = vmatpush1.msra.mxu0 %v86
    %1179 = vmatprep.subr.mxu0 %v91
    %1180 = vmatpush1.msra.mxu0 %v90
    %1181 = vmatprep.subr.mxu0 %v95
    %1182 = vmatpush1.msra.mxu0 %v94
    %1183 = vmatprep.subr.mxu0 %v99
    %1184 = vmatpush1.msra.mxu0 %v98
    %1185 = vmatprep.subr.mxu0 %v103
    %1186 = vmatpush1.msra.mxu0 %v102
    %1187 = vmatprep.subr.mxu0 0.0
    %1188 = vmatpush1.msra.mxu0 0.0
    %1189 = vmatprep.subr.mxu0 0.0
    %1190 = vmatpush1.msra.mxu0 0.0
    %1191 = vmatprep.subr.mxu0 0.0
    %1192 = vmatpush1.msra.mxu0 0.0
    %1193 = vmatprep.subr.mxu0 0.0
    %1194 = vmatpush1.msra.mxu0 0.0
    %1195 = vmatprep.subr.mxu0 0.0
    %1196 = vmatpush1.msra.mxu0 0.0
    %1197 = vmatprep.subr.mxu0 0.0
    %1198 = vmatpush1.msra.mxu0 0.0
    %1199 = vmatprep.subr.mxu0 0.0
    %1200 = vmatpush1.msra.mxu0 0.0
    %1201 = vmatprep.subr.mxu0 0.0
    %1202 = vmatpush1.msra.mxu0 0.0
    %1203 = vmatprep.subr.mxu0 0.0
    %1204 = vmatpush1.msra.mxu0 0.0
    %1205 = vmatprep.subr.mxu0 0.0
    %1206 = vmatpush1.msra.mxu0 0.0
    %1207 = vmatprep.subr.mxu0 0.0
    %1208 = vmatpush1.msra.mxu0 0.0
    %1209 = vmatprep.subr.mxu0 0.0
    %1210 = vmatpush1.msra.mxu0 0.0
    %1211 = vmatprep.subr.mxu0 0.0
    %1212 = vmatpush1.msra.mxu0 0.0
    %1213 = vmatprep.subr.mxu0 0.0
    %1214 = vmatpush1.msra.mxu0 0.0
    %1215 = vmatprep.subr.mxu0 0.0
    %1216 = vmatpush1.msra.mxu0 0.0
    %1217 = vmatprep.subr.mxu0 0.0
    %1218 = vmatpush1.msra.mxu0 0.0
    %1219 = vmatprep.mubr.f32.mxu0 0.0
    %1220 = vmatmul.mubr.f32.gmra.mrb[0].mxu0 %v1082
    %v1221 = vpop.f32.mrb[0].mxu0
    %v1222 = vadd.f32 0.0, %v1221
    %v1223 = vpop.f32.mrb[0].mxu0
    %v1224 = vadd.f32 0.0, %v1223
    %1225 = vdwg.mxu0
    %v1230 = vrot.slane %v1151, 3
    %v1231 = vrot.slane %v1153, 3
    %v1232 = vrot.slane %v1222, 3
    %v1233 = vrot.slane %v1224, 3
    %v1238 = vadd.f32 %v158, %v1230
    %v1239 = vadd.f32 %v159, %v1231
    %v1240 = vadd.f32 %v160, %v1232
    %v1241 = vadd.f32 %v161, %v1233
    %v1242 = vxor.u32 %v1238, 2147483648
    %v1243 = vmul.f32 %v1242, 1.442695
    %v1244 = vpow.pop %v1243
    %v1245 = vadd.f32 %v1244, 1.0
    %v1246 = vrcp.pop %v1245
    %v1247 = vmul.f32 1.0, %v1246
    %v1248 = vxor.u32 %v1239, 2147483648
    %v1249 = vmul.f32 %v1248, 1.442695
    %v1250 = vpow.pop %v1249
    %v1251 = vadd.f32 %v1250, 1.0
    %v1252 = vrcp.pop %v1251
    %v1253 = vmul.f32 1.0, %v1252
    %v1254 = vtanh.pop %v1240
    %v1255 = vxor.u32 %v1241, 2147483648
    %v1256 = vmul.f32 %v1255, 1.442695
    %v1257 = vpow.pop %v1256
    %v1258 = vadd.f32 %v1257, 1.0
    %v1259 = vrcp.pop %v1258
    %v1260 = vmul.f32 1.0, %v1259
    %v1262 = vrot.slane %v1078, 7
    %v1264 = vmul.f32 %v1253, %v1262
    %v1265 = vmul.f32 %v1247, %v1254
    %v1266 = vadd.f32 %v1264, %v1265
    %v1267 = vtanh.pop %v1266
    %v1268 = vmul.f32 %v1260, %v1267
    %v1270 = vrot.slane %v1268, 5
    %1272 = vmatprep.subr.mxu0 %v41
    %1273 = vmatpush1.msra.mxu0 %v40
    %1274 = vmatprep.subr.mxu0 %v45
    %1275 = vmatpush1.msra.mxu0 %v44
    %1276 = vmatprep.subr.mxu0 %v49
    %1277 = vmatpush1.msra.mxu0 %v48
    %1278 = vmatprep.subr.mxu0 %v53
    %1279 = vmatpush1.msra.mxu0 %v52
    %1280 = vmatprep.subr.mxu0 %v57
    %1281 = vmatpush1.msra.mxu0 %v56
    %1282 = vmatprep.subr.mxu0 %v61
    %1283 = vmatpush1.msra.mxu0 %v60
    %1284 = vmatprep.subr.mxu0 %v65
    %1285 = vmatpush1.msra.mxu0 %v64
    %1286 = vmatprep.subr.mxu0 %v69
    %1287 = vmatpush1.msra.mxu0 %v68
    %1288 = vmatprep.subr.mxu0 %v73
    %1289 = vmatpush1.msra.mxu0 %v72
    %1290 = vmatprep.subr.mxu0 %v77
    %1291 = vmatpush1.msra.mxu0 %v76
    %1292 = vmatprep.subr.mxu0 %v81
    %1293 = vmatpush1.msra.mxu0 %v80
    %1294 = vmatprep.subr.mxu0 %v85
    %1295 = vmatpush1.msra.mxu0 %v84
    %1296 = vmatprep.subr.mxu0 %v89
    %1297 = vmatpush1.msra.mxu0 %v88
    %1298 = vmatprep.subr.mxu0 %v93
    %1299 = vmatpush1.msra.mxu0 %v92
    %1300 = vmatprep.subr.mxu0 %v97
    %1301 = vmatpush1.msra.mxu0 %v96
    %1302 = vmatprep.subr.mxu0 %v101
    %1303 = vmatpush1.msra.mxu0 %v100
    %1304 = vmatprep.subr.mxu0 0.0
    %1305 = vmatpush1.msra.mxu0 0.0
    %1306 = vmatprep.subr.mxu0 0.0
    %1307 = vmatpush1.msra.mxu0 0.0
    %1308 = vmatprep.subr.mxu0 0.0
    %1309 = vmatpush1.msra.mxu0 0.0
    %1310 = vmatprep.subr.mxu0 0.0
    %1311 = vmatpush1.msra.mxu0 0.0
    %1312 = vmatprep.subr.mxu0 0.0
    %1313 = vmatpush1.msra.mxu0 0.0
    %1314 = vmatprep.subr.mxu0 0.0
    %1315 = vmatpush1.msra.mxu0 0.0
    %1316 = vmatprep.subr.mxu0 0.0
    %1317 = vmatpush1.msra.mxu0 0.0
    %1318 = vmatprep.subr.mxu0 0.0
    %1319 = vmatpush1.msra.mxu0 0.0
    %1320 = vmatprep.subr.mxu0 0.0
    %1321 = vmatpush1.msra.mxu0 0.0
    %1322 = vmatprep.subr.mxu0 0.0
    %1323 = vmatpush1.msra.mxu0 0.0
    %1324 = vmatprep.subr.mxu0 0.0
    %1325 = vmatpush1.msra.mxu0 0.0
    %1326 = vmatprep.subr.mxu0 0.0
    %1327 = vmatpush1.msra.mxu0 0.0
    %1328 = vmatprep.subr.mxu0 0.0
    %1329 = vmatpush1.msra.mxu0 0.0
    %1330 = vmatprep.subr.mxu0 0.0
    %1331 = vmatpush1.msra.mxu0 0.0
    %1332 = vmatprep.subr.mxu0 0.0
    %1333 = vmatpush1.msra.mxu0 0.0
    %1334 = vmatprep.subr.mxu0 0.0
    %1335 = vmatpush1.msra.mxu0 0.0
    %1336 = vmatprep.mubr.f32.mxu0 0.0
    %1337 = vmatmul.mubr.f32.gmra.mrb[0].mxu0 %v1270
    %v1338 = vpop.f32.mrb[0].mxu0
    %v1339 = vadd.f32 0.0, %v1338
    %v1340 = vpop.f32.mrb[0].mxu0
    %v1341 = vadd.f32 0.0, %v1340
    %1342 = vdwg.mxu0
    %1343 = vmatprep.subr.mxu0 %v43
    %1344 = vmatpush1.msra.mxu0 %v42
    %1345 = vmatprep.subr.mxu0 %v47
    %1346 = vmatpush1.msra.mxu0 %v46
    %1347 = vmatprep.subr.mxu0 %v51
    %1348 = vmatpush1.msra.mxu0 %v50
    %1349 = vmatprep.subr.mxu0 %v55
    %1350 = vmatpush1.msra.mxu0 %v54
    %1351 = vmatprep.subr.mxu0 %v59
    %1352 = vmatpush1.msra.mxu0 %v58
    %1353 = vmatprep.subr.mxu0 %v63
    %1354 = vmatpush1.msra.mxu0 %v62
    %1355 = vmatprep.subr.mxu0 %v67
    %1356 = vmatpush1.msra.mxu0 %v66
    %1357 = vmatprep.subr.mxu0 %v71
    %1358 = vmatpush1.msra.mxu0 %v70
    %1359 = vmatprep.subr.mxu0 %v75
    %1360 = vmatpush1.msra.mxu0 %v74
    %1361 = vmatprep.subr.mxu0 %v79
    %1362 = vmatpush1.msra.mxu0 %v78
    %1363 = vmatprep.subr.mxu0 %v83
    %1364 = vmatpush1.msra.mxu0 %v82
    %1365 = vmatprep.subr.mxu0 %v87
    %1366 = vmatpush1.msra.mxu0 %v86
    %1367 = vmatprep.subr.mxu0 %v91
    %1368 = vmatpush1.msra.mxu0 %v90
    %1369 = vmatprep.subr.mxu0 %v95
    %1370 = vmatpush1.msra.mxu0 %v94
    %1371 = vmatprep.subr.mxu0 %v99
    %1372 = vmatpush1.msra.mxu0 %v98
    %1373 = vmatprep.subr.mxu0 %v103
    %1374 = vmatpush1.msra.mxu0 %v102
    %1375 = vmatprep.subr.mxu0 0.0
    %1376 = vmatpush1.msra.mxu0 0.0
    %1377 = vmatprep.subr.mxu0 0.0
    %1378 = vmatpush1.msra.mxu0 0.0
    %1379 = vmatprep.subr.mxu0 0.0
    %1380 = vmatpush1.msra.mxu0 0.0
    %1381 = vmatprep.subr.mxu0 0.0
    %1382 = vmatpush1.msra.mxu0 0.0
    %1383 = vmatprep.subr.mxu0 0.0
    %1384 = vmatpush1.msra.mxu0 0.0
    %1385 = vmatprep.subr.mxu0 0.0
    %1386 = vmatpush1.msra.mxu0 0.0
    %1387 = vmatprep.subr.mxu0 0.0
    %1388 = vmatpush1.msra.mxu0 0.0
    %1389 = vmatprep.subr.mxu0 0.0
    %1390 = vmatpush1.msra.mxu0 0.0
    %1391 = vmatprep.subr.mxu0 0.0
    %1392 = vmatpush1.msra.mxu0 0.0
    %1393 = vmatprep.subr.mxu0 0.0
    %1394 = vmatpush1.msra.mxu0 0.0
    %1395 = vmatprep.subr.mxu0 0.0
    %1396 = vmatpush1.msra.mxu0 0.0
    %1397 = vmatprep.subr.mxu0 0.0
    %1398 = vmatpush1.msra.mxu0 0.0
    %1399 = vmatprep.subr.mxu0 0.0
    %1400 = vmatpush1.msra.mxu0 0.0
    %1401 = vmatprep.subr.mxu0 0.0
    %1402 = vmatpush1.msra.mxu0 0.0
    %1403 = vmatprep.subr.mxu0 0.0
    %1404 = vmatpush1.msra.mxu0 0.0
    %1405 = vmatprep.subr.mxu0 0.0
    %1406 = vmatpush1.msra.mxu0 0.0
    %1407 = vmatprep.mubr.f32.mxu0 0.0
    %1408 = vmatmul.mubr.f32.gmra.mrb[0].mxu0 %v1270
    %v1409 = vpop.f32.mrb[0].mxu0
    %v1410 = vadd.f32 0.0, %v1409
    %v1411 = vpop.f32.mrb[0].mxu0
    %v1412 = vadd.f32 0.0, %v1411
    %1413 = vdwg.mxu0
    %v1418 = vrot.slane %v1339, 2
    %v1419 = vrot.slane %v1341, 2
    %v1420 = vrot.slane %v1410, 2
    %v1421 = vrot.slane %v1412, 2
    %v1426 = vadd.f32 %v158, %v1418
    %v1427 = vadd.f32 %v159, %v1419
    %v1428 = vadd.f32 %v160, %v1420
    %v1429 = vadd.f32 %v161, %v1421
    %v1430 = vxor.u32 %v1426, 2147483648
    %v1431 = vmul.f32 %v1430, 1.442695
    %v1432 = vpow.pop %v1431
    %v1433 = vadd.f32 %v1432, 1.0
    %v1434 = vrcp.pop %v1433
    %v1435 = vmul.f32 1.0, %v1434
    %v1436 = vxor.u32 %v1427, 2147483648
    %v1437 = vmul.f32 %v1436, 1.442695
    %v1438 = vpow.pop %v1437
    %v1439 = vadd.f32 %v1438, 1.0
    %v1440 = vrcp.pop %v1439
    %v1441 = vmul.f32 1.0, %v1440
    %v1442 = vtanh.pop %v1428
    %v1443 = vxor.u32 %v1429, 2147483648
    %v1444 = vmul.f32 %v1443, 1.442695
    %v1445 = vpow.pop %v1444
    %v1446 = vadd.f32 %v1445, 1.0
    %v1447 = vrcp.pop %v1446
    %v1448 = vmul.f32 1.0, %v1447
    %v1450 = vrot.slane %v1266, 7
    %v1452 = vmul.f32 %v1441, %v1450
    %v1453 = vmul.f32 %v1435, %v1442
    %v1454 = vadd.f32 %v1452, %v1453
    %v1455 = vtanh.pop %v1454
    %v1456 = vmul.f32 %v1448, %v1455
    %v1458 = vrot.slane %v1456, 6
    %1460 = vmatprep.subr.mxu0 %v41
    %1461 = vmatpush1.msra.mxu0 %v40
    %1462 = vmatprep.subr.mxu0 %v45
    %1463 = vmatpush1.msra.mxu0 %v44
    %1464 = vmatprep.subr.mxu0 %v49
    %1465 = vmatpush1.msra.mxu0 %v48
    %1466 = vmatprep.subr.mxu0 %v53
    %1467 = vmatpush1.msra.mxu0 %v52
    %1468 = vmatprep.subr.mxu0 %v57
    %1469 = vmatpush1.msra.mxu0 %v56
    %1470 = vmatprep.subr.mxu0 %v61
    %1471 = vmatpush1.msra.mxu0 %v60
    %1472 = vmatprep.subr.mxu0 %v65
    %1473 = vmatpush1.msra.mxu0 %v64
    %1474 = vmatprep.subr.mxu0 %v69
    %1475 = vmatpush1.msra.mxu0 %v68
    %1476 = vmatprep.subr.mxu0 %v73
    %1477 = vmatpush1.msra.mxu0 %v72
    %1478 = vmatprep.subr.mxu0 %v77
    %1479 = vmatpush1.msra.mxu0 %v76
    %1480 = vmatprep.subr.mxu0 %v81
    %1481 = vmatpush1.msra.mxu0 %v80
    %1482 = vmatprep.subr.mxu0 %v85
    %1483 = vmatpush1.msra.mxu0 %v84
    %1484 = vmatprep.subr.mxu0 %v89
    %1485 = vmatpush1.msra.mxu0 %v88
    %1486 = vmatprep.subr.mxu0 %v93
    %1487 = vmatpush1.msra.mxu0 %v92
    %1488 = vmatprep.subr.mxu0 %v97
    %1489 = vmatpush1.msra.mxu0 %v96
    %1490 = vmatprep.subr.mxu0 %v101
    %1491 = vmatpush1.msra.mxu0 %v100
    %1492 = vmatprep.subr.mxu0 0.0
    %1493 = vmatpush1.msra.mxu0 0.0
    %1494 = vmatprep.subr.mxu0 0.0
    %1495 = vmatpush1.msra.mxu0 0.0
    %1496 = vmatprep.subr.mxu0 0.0
    %1497 = vmatpush1.msra.mxu0 0.0
    %1498 = vmatprep.subr.mxu0 0.0
    %1499 = vmatpush1.msra.mxu0 0.0
    %1500 = vmatprep.subr.mxu0 0.0
    %1501 = vmatpush1.msra.mxu0 0.0
    %1502 = vmatprep.subr.mxu0 0.0
    %1503 = vmatpush1.msra.mxu0 0.0
    %1504 = vmatprep.subr.mxu0 0.0
    %1505 = vmatpush1.msra.mxu0 0.0
    %1506 = vmatprep.subr.mxu0 0.0
    %1507 = vmatpush1.msra.mxu0 0.0
    %1508 = vmatprep.subr.mxu0 0.0
    %1509 = vmatpush1.msra.mxu0 0.0
    %1510 = vmatprep.subr.mxu0 0.0
    %1511 = vmatpush1.msra.mxu0 0.0
    %1512 = vmatprep.subr.mxu0 0.0
    %1513 = vmatpush1.msra.mxu0 0.0
    %1514 = vmatprep.subr.mxu0 0.0
    %1515 = vmatpush1.msra.mxu0 0.0
    %1516 = vmatprep.subr.mxu0 0.0
    %1517 = vmatpush1.msra.mxu0 0.0
    %1518 = vmatprep.subr.mxu0 0.0
    %1519 = vmatpush1.msra.mxu0 0.0
    %1520 = vmatprep.subr.mxu0 0.0
    %1521 = vmatpush1.msra.mxu0 0.0
    %1522 = vmatprep.subr.mxu0 0.0
    %1523 = vmatpush1.msra.mxu0 0.0
    %1524 = vmatprep.mubr.f32.mxu0 0.0
    %1525 = vmatmul.mubr.f32.gmra.mrb[0].mxu0 %v1458
    %v1526 = vpop.f32.mrb[0].mxu0
    %v1527 = vadd.f32 0.0, %v1526
    %v1528 = vpop.f32.mrb[0].mxu0
    %v1529 = vadd.f32 0.0, %v1528
    %1530 = vdwg.mxu0
    %1531 = vmatprep.subr.mxu0 %v43
    %1532 = vmatpush1.msra.mxu0 %v42
    %1533 = vmatprep.subr.mxu0 %v47
    %1534 = vmatpush1.msra.mxu0 %v46
    %1535 = vmatprep.subr.mxu0 %v51
    %1536 = vmatpush1.msra.mxu0 %v50
    %1537 = vmatprep.subr.mxu0 %v55
    %1538 = vmatpush1.msra.mxu0 %v54
    %1539 = vmatprep.subr.mxu0 %v59
    %1540 = vmatpush1.msra.mxu0 %v58
    %1541 = vmatprep.subr.mxu0 %v63
    %1542 = vmatpush1.msra.mxu0 %v62
    %1543 = vmatprep.subr.mxu0 %v67
    %1544 = vmatpush1.msra.mxu0 %v66
    %1545 = vmatprep.subr.mxu0 %v71
    %1546 = vmatpush1.msra.mxu0 %v70
    %1547 = vmatprep.subr.mxu0 %v75
    %1548 = vmatpush1.msra.mxu0 %v74
    %1549 = vmatprep.subr.mxu0 %v79
    %1550 = vmatpush1.msra.mxu0 %v78
    %1551 = vmatprep.subr.mxu0 %v83
    %1552 = vmatpush1.msra.mxu0 %v82
    %1553 = vmatprep.subr.mxu0 %v87
    %1554 = vmatpush1.msra.mxu0 %v86
    %1555 = vmatprep.subr.mxu0 %v91
    %1556 = vmatpush1.msra.mxu0 %v90
    %1557 = vmatprep.subr.mxu0 %v95
    %1558 = vmatpush1.msra.mxu0 %v94
    %1559 = vmatprep.subr.mxu0 %v99
    %1560 = vmatpush1.msra.mxu0 %v98
    %1561 = vmatprep.subr.mxu0 %v103
    %1562 = vmatpush1.msra.mxu0 %v102
    %1563 = vmatprep.subr.mxu0 0.0
    %1564 = vmatpush1.msra.mxu0 0.0
    %1565 = vmatprep.subr.mxu0 0.0
    %1566 = vmatpush1.msra.mxu0 0.0
    %1567 = vmatprep.subr.mxu0 0.0
    %1568 = vmatpush1.msra.mxu0 0.0
    %1569 = vmatprep.subr.mxu0 0.0
    %1570 = vmatpush1.msra.mxu0 0.0
    %1571 = vmatprep.subr.mxu0 0.0
    %1572 = vmatpush1.msra.mxu0 0.0
    %1573 = vmatprep.subr.mxu0 0.0
    %1574 = vmatpush1.msra.mxu0 0.0
    %1575 = vmatprep.subr.mxu0 0.0
    %1576 = vmatpush1.msra.mxu0 0.0
    %1577 = vmatprep.subr.mxu0 0.0
    %1578 = vmatpush1.msra.mxu0 0.0
    %1579 = vmatprep.subr.mxu0 0.0
    %1580 = vmatpush1.msra.mxu0 0.0
    %1581 = vmatprep.subr.mxu0 0.0
    %1582 = vmatpush1.msra.mxu0 0.0
    %1583 = vmatprep.subr.mxu0 0.0
    %1584 = vmatpush1.msra.mxu0 0.0
    %1585 = vmatprep.subr.mxu0 0.0
    %1586 = vmatpush1.msra.mxu0 0.0
    %1587 = vmatprep.subr.mxu0 0.0
    %1588 = vmatpush1.msra.mxu0 0.0
    %1589 = vmatprep.subr.mxu0 0.0
    %1590 = vmatpush1.msra.mxu0 0.0
    %1591 = vmatprep.subr.mxu0 0.0
    %1592 = vmatpush1.msra.mxu0 0.0
    %1593 = vmatprep.subr.mxu0 0.0
    %1594 = vmatpush1.msra.mxu0 0.0
    %1595 = vmatprep.mubr.f32.mxu0 0.0
    %1596 = vmatmul.mubr.f32.gmra.mrb[0].mxu0 %v1458
    %v1597 = vpop.f32.mrb[0].mxu0
    %v1598 = vadd.f32 0.0, %v1597
    %v1599 = vpop.f32.mrb[0].mxu0
    %v1600 = vadd.f32 0.0, %v1599
    %1601 = vdwg.mxu0
    %v1606 = vrot.slane %v1527, 1
    %v1607 = vrot.slane %v1529, 1
    %v1608 = vrot.slane %v1598, 1
    %v1609 = vrot.slane %v1600, 1
    %v1614 = vadd.f32 %v158, %v1606
    %v1615 = vadd.f32 %v159, %v1607
    %v1616 = vadd.f32 %v160, %v1608
    %v1617 = vadd.f32 %v161, %v1609
    %v1618 = vxor.u32 %v1614, 2147483648
    %v1619 = vmul.f32 %v1618, 1.442695
    %v1620 = vpow.pop %v1619
    %v1621 = vadd.f32 %v1620, 1.0
    %v1622 = vrcp.pop %v1621
    %v1623 = vmul.f32 1.0, %v1622
    %v1624 = vxor.u32 %v1615, 2147483648
    %v1625 = vmul.f32 %v1624, 1.442695
    %v1626 = vpow.pop %v1625
    %v1627 = vadd.f32 %v1626, 1.0
    %v1628 = vrcp.pop %v1627
    %v1629 = vmul.f32 1.0, %v1628
    %v1630 = vtanh.pop %v1616
    %v1631 = vxor.u32 %v1617, 2147483648
    %v1632 = vmul.f32 %v1631, 1.442695
    %v1633 = vpow.pop %v1632
    %v1634 = vadd.f32 %v1633, 1.0
    %v1635 = vrcp.pop %v1634
    %v1636 = vmul.f32 1.0, %v1635
    %v1638 = vrot.slane %v1454, 7
    %v1640 = vmul.f32 %v1629, %v1638
    %v1641 = vmul.f32 %v1623, %v1630
    %v1642 = vadd.f32 %v1640, %v1641
    %v1643 = vtanh.pop %v1642
    %v1644 = vmul.f32 %v1636, %v1643
    %v1645 = vld [vmem:[%s4] sm:$0x1]
    %v1647 = vlaneseq
    %v1648 = vshrl.u32 %v1647, 7
    %v1649 = vsub.s32 0, %v1648
    %v1650 = vrot.slane %v1645, %v1649
    %v1652 = vmul.f32 %v1644, %v1650
    %vm1653 = vcmask 1047559
    %v1654 = vsel %vm1653, %v1652, 0.0
    %1655 = vadd.xlane.f32.xlu0 %v1654
    %v1656 = vpop.xlane.xlu0 %1655
    %v1657 = vld [vmem:[#allocation2] sm:$0x1]
    %v1659 = vlaneseq
    %v1660 = vshrl.u32 %v1659, 7
    %v1661 = vsub.s32 0, %v1660
    %v1662 = vrot.slane %v1657, %v1661
    %v1664 = vadd.f32 %v1656, %v1662
    %vm1665 = vcmask 7175
    %1666 = vst.msk [vmem:[#allocation6 - $0x7] sm:$0x80] %vm1665, %v1664
    // Predicated region
    $region30: #{lstm_forward.1} parent=1 // pred_check
      _
    $region31: #{lstm_forward.1} parent=1 // pred_check_branch
      %1668 = sbr.rel (0) target = $region33
    $region32: #{lstm_forward.1} parent=1 // pred_region
      %s1670 = ssub.s32 16, 16
      %1671 = vsyncadd [#allocation5], %s1670
      %s1673 = sshll.u32 [#allocation6], 4
      %s1674 = int_to_ptr.vmem [resolvable:$true] %s1673
      %1676 = dma.vmem_to_hbm [thread:$0]  %s1674, 16, %s6, [#allocation5]
    $region33: #{lstm_forward.1} parent=1 // pred_fallthru
      _
    // Predicated region
    $region34: #{lstm_forward.1} parent=1 // pred_check
      _
    $region35: #{lstm_forward.1} parent=1 // pred_check_branch
      %1678 = sbr.rel (0) target = $region37
    $region36: #{lstm_forward.1} parent=1 // pred_region
      %1679 = dma.done [#allocation5], 16
    $region37: #{lstm_forward.1} parent=1 // pred_fallthru
      _
    %1680 = vsyncpa [#allocation4], 1
    %1681 = vsyncpa [#allocation5], 1

</llo_original>
